<compile_context>
chip_gen: v7x
topology: tpu7x:2x2x1
jax: 0.10.0
libtpu: 0.0.40
codegen_flags: <defaults>
</compile_context>

<pallas_src>
import functools

import jax
import jax.numpy as jnp
from jax import lax
from jax.experimental import pallas as pl
from jax.experimental.pallas import tpu as pltpu

KSIZE = 7
PAD = 3


def _spatial_attn_kernel(w_ref, x_ref, o_ref, sum_ref, max_ref, *, C, W, tC):
    # w_ref   : SMEM (2*7*7,) f32   scalar-prefetched conv weight, layout [c, kh, kw]
    # x_ref   : VMEM (1, tC, HWp)   one channel tile of one batch element
    # o_ref   : VMEM (1, 1, HWp)
    # sum_ref : VMEM (8, HWp) f32   sublane-dense running channel sum (scratch)
    # max_ref : VMEM (8, HWp) f32   sublane-dense running channel max (scratch)
    HWp = x_ref.shape[2]
    ci = pl.program_id(1)
    full8 = (tC % 8 == 0)

    # ---- fused channel reduction: load the tile once, derive sum and max ----
    xb = x_ref[0].astype(jnp.float32)                       # (tC, HWp)
    if full8:
        x3 = xb.reshape(tC // 8, 8, HWp)
        part_sum = jnp.sum(x3, axis=0)                      # (8, HWp) pure VPU adds
        part_max = jnp.max(x3, axis=0)                      # (8, HWp) pure VPU maxes
    else:
        # Small-C fallback (tC == C, not a multiple of 8): one cross-sublane
        # reduce, padded with identities so the (8, HWp) scratch stays uniform.
        ps = jnp.sum(xb, axis=0, keepdims=True)             # (1, HWp)
        pm = jnp.max(xb, axis=0, keepdims=True)             # (1, HWp)
        part_sum = jnp.concatenate(
            [ps, jnp.zeros((7, HWp), jnp.float32)], axis=0)
        part_max = jnp.concatenate(
            [pm, jnp.full((7, HWp), -jnp.inf, jnp.float32)], axis=0)

    @pl.when(ci == 0)
    def _init():
        sum_ref[...] = part_sum
        max_ref[...] = part_max

    @pl.when(ci > 0)
    def _accum():
        sum_ref[...] = sum_ref[...] + part_sum
        max_ref[...] = jnp.maximum(max_ref[...], part_max)

    # ---- finalize: single 8->1 reduce, flat 7x7 conv, sigmoid ----
    @pl.when(ci == pl.num_programs(1) - 1)
    def _finalize():
        avg = jnp.sum(sum_ref[...], axis=0, keepdims=True) * (1.0 / C)   # (1, HWp)
        mx = jnp.max(max_ref[...], axis=0, keepdims=True)                # (1, HWp)

        padf = PAD * W + PAD                            # max |flat shift|
        zpad = jnp.zeros((1, padf), jnp.float32)
        # zero-extension built ONCE (vertical out-of-range taps read zeros)
        a_e = jnp.concatenate([zpad, avg, zpad], axis=1)
        m_e = jnp.concatenate([zpad, mx, zpad], axis=1)

        # per-pixel column id, computed in-kernel (no extra VMEM input)
        col = lax.broadcasted_iota(jnp.int32, (1, HWp), 1) % W

        partials = []
        for kw in range(KSIZE):
            dw = kw - PAD
            acc_kw = jnp.zeros((1, HWp), jnp.float32)
            for kh in range(KSIZE):
                dh = kh - PAD
                d = dh * W + dw
                wa = w_ref[kh * KSIZE + kw]                  # avg-channel tap
                wm = w_ref[KSIZE * KSIZE + kh * KSIZE + kw]  # max-channel tap
                acc_kw = (acc_kw
                          + wa * a_e[:, padf + d:padf + d + HWp]
                          + wm * m_e[:, padf + d:padf + d + HWp])
            if dw != 0:
                # output-side horizontal validity: input column c+dw must be
                # inside [0, W); invalid outputs get the zero-pad contribution.
                valid = jnp.logical_and(col >= -dw, col < W - dw)
                acc_kw = jnp.where(valid, acc_kw, 0.0)
            partials.append(acc_kw)

        # tree-sum the 7 independent per-kw chains
        while len(partials) > 1:
            nxt = [partials[i] + partials[i + 1]
                   for i in range(0, len(partials) - 1, 2)]
            if len(partials) % 2:
                nxt.append(partials[-1])
            partials = nxt

        o_ref[0] = jax.nn.sigmoid(partials[0]).astype(o_ref.dtype)


def _pick_channel_block(C, HWp, itemsize, budget_bytes):
    """Largest legal channel tile whose x block fits the per-tile budget.

    Legal tiles: tC == C (full extent) or a multiple-of-8 divisor of C (the
    block's second-minor dim must be a multiple of 8 or the full extent).
    """
    if C * HWp * itemsize <= budget_bytes:
        return C
    best = None
    smallest = None
    for d in range(8, C, 8):
        if C % d:
            continue
        if smallest is None:
            smallest = d
        if d * HWp * itemsize <= budget_bytes:
            best = d
    if best is not None:
        return best
    # Nothing fits the budget: smallest legal tile (vmem_limit below is sized
    # from whatever is actually picked, so no silent scoped-VMEM overflow).
    return smallest if smallest is not None else C


def spatial_attention(x, weight, *, channel_block=None):
    """x: (N, C, H, W) f32/bf16, weight: (1, 2, 7, 7)  ->  (N, 1, H, W) f32."""
    N, C, H, W = x.shape
    assert weight.shape == (1, 2, KSIZE, KSIZE)
    HW = H * W
    HWp = ((HW + 127) // 128) * 128                     # lane-dense flat spatial dim

    w_flat = weight.reshape(-1).astype(jnp.float32)     # (98,), scalar-prefetched
    x_flat = x.reshape(N, C, HW)                        # free for contiguous NCHW
    if HWp != HW:
        x_flat = jnp.pad(x_flat, ((0, 0), (0, 0), (0, HWp - HW)))

    itemsize = jnp.dtype(x.dtype).itemsize

    # Generation-aware tile budget: double-buffered x tile lands in the
    # 8-16 MiB range on v5e/v6e (128 MiB VMEM) and ~8 MiB on v7x (64 MiB).
    try:
        vmem_cap = int(pltpu.get_tpu_info().vmem_capacity_bytes)
    except Exception:  # pragma: no cover - conservative fallback
        vmem_cap = 128 << 20
    tile_budget = min(8 << 20, vmem_cap // 16)

    tC = channel_block if channel_block is not None else _pick_channel_block(
        C, HWp, itemsize, tile_budget)
    assert C % tC == 0, "channel tile must divide C"
    assert tC == C or tC % 8 == 0, "channel tile must be a multiple of 8 or full C"
    nC = C // tC

    # Explicit VMEM limit sized from the actual tile.
    needed = (2 * tC * HWp * itemsize       # double-buffered x tile
              + 2 * 1 * HWp * 4             # double-buffered output tile
              + 2 * 8 * HWp * 4             # sum / max scratch
              + 32 * HWp * 4                # finalize temporaries (maps, shifts)
              + (2 << 20))                  # headroom
    soft_cap = max(vmem_cap - (16 << 20), 32 << 20)
    vmem_limit = min(max(needed, 32 << 20), soft_cap)
    vmem_limit = int(max(vmem_limit, needed))

    kernel = functools.partial(_spatial_attn_kernel, C=C, W=W, tC=tC)

    out_flat = pl.pallas_call(
        kernel,
        out_shape=jax.ShapeDtypeStruct((N, 1, HWp), jnp.float32),
        grid_spec=pltpu.PrefetchScalarGridSpec(
            num_scalar_prefetch=1,                                   # conv weights
            grid=(N, nC),
            in_specs=[
                pl.BlockSpec((1, tC, HWp), lambda b, ci, w: (b, ci, 0)),  # x tile
            ],
            out_specs=pl.BlockSpec((1, 1, HWp), lambda b, ci, w: (b, 0, 0)),
            scratch_shapes=[
                pltpu.VMEM((8, HWp), jnp.float32),   # running channel sum
                pltpu.VMEM((8, HWp), jnp.float32),   # running channel max
            ],
        ),
        compiler_params=pltpu.CompilerParams(
            dimension_semantics=("parallel", "arbitrary"),
            vmem_limit_bytes=vmem_limit),
    )(w_flat, x_flat)

    # TODO(synk): for N==1 on v7x (2 TensorCores) add a 'parallel' spatial grid
    # axis (per-tile accumulators + halo on the finalize tile) so both cores
    # are busy; with only the batch axis parallel, one core idles.
    return out_flat[:, :, :HW].reshape(N, 1, H, W)


def _reference(x, weight):
    avg_out = jnp.mean(x, axis=1, keepdims=True)
    max_out = jnp.max(x, axis=1, keepdims=True)
    cat = jnp.concatenate([avg_out, max_out], axis=1)
    conv = lax.conv_general_dilated(
        cat, weight, window_strides=(1, 1),
        padding=((PAD, PAD), (PAD, PAD)),
        dimension_numbers=("NCHW", "OIHW", "NCHW"))
    return jax.nn.sigmoid(conv)


if __name__ == "__main__":
    key = jax.random.PRNGKey(0)
    kx, kw_key = jax.random.split(key)

    # Primary case: batch=2, channels=4, spatial=16x16.
    N, C, H, W = 2, 4, 16, 16
    x = jax.random.normal(kx, (N, C, H, W), dtype=jnp.float32)
    # deterministic synthetic conv weight: (out=1, in=2, 7, 7), no bias
    weight = 0.1 * jax.random.normal(kw_key, (1, 2, KSIZE, KSIZE), dtype=jnp.float32)

    out = jax.block_until_ready(spatial_attention(x, weight))
    ref = _reference(x, weight)
    assert out.shape == (N, 1, H, W)
    assert jnp.allclose(out, ref, atol=1e-5, rtol=1e-5), "mismatch vs JAX reference"

    # Multi-step channel path with sublane-dense (8, HW) accumulators.
    x2 = jax.random.normal(jax.random.PRNGKey(1), (N, 16, H, W), dtype=jnp.float32)
    out2 = jax.block_until_ready(spatial_attention(x2, weight, channel_block=8))
    assert jnp.allclose(out2, _reference(x2, weight), atol=1e-5, rtol=1e-5), \
        "mismatch vs JAX reference (multi-step channel path)"

    # Lane-padding path: H*W not a multiple of 128 (10*10 -> padded to 128).
    x3 = jax.random.normal(jax.random.PRNGKey(2), (1, 8, 10, 10), dtype=jnp.float32)
    out3 = jax.block_until_ready(spatial_attention(x3, weight))
    assert jnp.allclose(out3, _reference(x3, weight), atol=1e-5, rtol=1e-5), \
        "mismatch vs JAX reference (lane-padded spatial path)"

    print("KERNEL_OK")
</pallas_src>

<mosaic_0001>
module attributes {stable_mosaic.version = 11 : i64} {
  func.func @_spatial_attn_kernel(%arg0: i32, %arg1: i32, %arg2: memref<98xf32, #tpu.memory_space<smem>>, %arg3: memref<1x4x256xf32, #tpu.memory_space<vmem>>, %arg4: memref<1x1x256xf32, #tpu.memory_space<vmem>>, %arg5: memref<8x256xf32, #tpu.memory_space<vmem>>, %arg6: memref<8x256xf32, #tpu.memory_space<vmem>>) attributes {dimension_semantics = [#tpu.dimension_semantics<parallel>, #tpu.dimension_semantics<arbitrary>], iteration_bounds = array<i64: 2, 1>, scalar_prefetch = 1 : i64, scratch_operands = 2 : i64, tpu.core_type = #tpu.core_type<tc>, window_params = [{transform_indices = @transform_0, window_bounds = array<i64: 1, 4, 256>}, {transform_indices = @transform_1, window_bounds = array<i64: 1, 1, 256>}]} {
    %c0 = arith.constant 0 : index
    %c0_0 = arith.constant 0 : index
    %c0_1 = arith.constant 0 : index
    %0 = vector.load %arg3[%c0, %c0_0, %c0_1] : memref<1x4x256xf32, #tpu.memory_space<vmem>>, vector<1x4x256xf32>
    %1 = vector.shape_cast %0 : vector<1x4x256xf32> to vector<4x256xf32>
    %cst = arith.constant dense<0.000000e+00> : vector<256xf32>
    %2 = vector.multi_reduction <add>, %1, %cst [0] : vector<4x256xf32> to vector<256xf32>
    %3 = vector.shape_cast %2 : vector<256xf32> to vector<1x256xf32>
    %cst_2 = arith.constant dense<0xFF800000> : vector<256xf32>
    %4 = vector.multi_reduction <maximumf>, %1, %cst_2 [0] : vector<4x256xf32> to vector<256xf32>
    %5 = vector.shape_cast %4 : vector<256xf32> to vector<1x256xf32>
    %cst_3 = arith.constant 0.000000e+00 : f32
    %6 = vector.broadcast %cst_3 : f32 to vector<7x256xf32>
    %7 = tpu.concatenate %3, %6 in 0 : vector<1x256xf32>, vector<7x256xf32> -> vector<8x256xf32>
    %cst_4 = arith.constant 0xFF800000 : f32
    %8 = vector.broadcast %cst_4 : f32 to vector<7x256xf32>
    %9 = tpu.concatenate %5, %8 in 0 : vector<1x256xf32>, vector<7x256xf32> -> vector<8x256xf32>
    %c0_i32 = arith.constant 0 : i32
    %10 = arith.cmpi eq, %arg1, %c0_i32 : i32
    %11 = arith.extui %10 : i1 to i32
    %c0_i32_5 = arith.constant 0 : i32
    %12 = arith.cmpi ne, %11, %c0_i32_5 : i32
    scf.if %12 {
      %c0_10 = arith.constant 0 : index
      %c0_11 = arith.constant 0 : index
      %19 = vector.load %arg5[%c0_10, %c0_11] : memref<8x256xf32, #tpu.memory_space<vmem>>, vector<8x256xf32>
      tpu.vector_store %arg5[%c0_10, %c0_11], %7 {strides = array<i32>} : memref<8x256xf32, #tpu.memory_space<vmem>>, vector<8x256xf32>,
      %c0_12 = arith.constant 0 : index
      %c0_13 = arith.constant 0 : index
      %20 = vector.load %arg6[%c0_12, %c0_13] : memref<8x256xf32, #tpu.memory_space<vmem>>, vector<8x256xf32>
      tpu.vector_store %arg6[%c0_12, %c0_13], %9 {strides = array<i32>} : memref<8x256xf32, #tpu.memory_space<vmem>>, vector<8x256xf32>,
    } else {
    }
    %c0_i32_6 = arith.constant 0 : i32
    %13 = arith.cmpi sgt, %arg1, %c0_i32_6 : i32
    %14 = arith.extui %13 : i1 to i32
    %c0_i32_7 = arith.constant 0 : i32
    %15 = arith.cmpi ne, %14, %c0_i32_7 : i32
    scf.if %15 {
      %c0_10 = arith.constant 0 : index
      %c0_11 = arith.constant 0 : index
      %19 = vector.load %arg5[%c0_10, %c0_11] : memref<8x256xf32, #tpu.memory_space<vmem>>, vector<8x256xf32>
      %20 = arith.addf %19, %7 : vector<8x256xf32>
      %c0_12 = arith.constant 0 : index
      %c0_13 = arith.constant 0 : index
      %21 = vector.load %arg5[%c0_12, %c0_13] : memref<8x256xf32, #tpu.memory_space<vmem>>, vector<8x256xf32>
      tpu.vector_store %arg5[%c0_12, %c0_13], %20 {strides = array<i32>} : memref<8x256xf32, #tpu.memory_space<vmem>>, vector<8x256xf32>,
      %c0_14 = arith.constant 0 : index
      %c0_15 = arith.constant 0 : index
      %22 = vector.load %arg6[%c0_14, %c0_15] : memref<8x256xf32, #tpu.memory_space<vmem>>, vector<8x256xf32>
      %23 = arith.maximumf %22, %9 : vector<8x256xf32>
      %c0_16 = arith.constant 0 : index
      %c0_17 = arith.constant 0 : index
      %24 = vector.load %arg6[%c0_16, %c0_17] : memref<8x256xf32, #tpu.memory_space<vmem>>, vector<8x256xf32>
      tpu.vector_store %arg6[%c0_16, %c0_17], %23 {strides = array<i32>} : memref<8x256xf32, #tpu.memory_space<vmem>>, vector<8x256xf32>,
    } else {
    }
    %c0_i32_8 = arith.constant 0 : i32
    %16 = arith.cmpi eq, %arg1, %c0_i32_8 : i32
    %17 = arith.extui %16 : i1 to i32
    %c0_i32_9 = arith.constant 0 : i32
    %18 = arith.cmpi ne, %17, %c0_i32_9 : i32
    scf.if %18 {
      %c0_10 = arith.constant 0 : index
      %c0_11 = arith.constant 0 : index
      %19 = vector.load %arg5[%c0_10, %c0_11] : memref<8x256xf32, #tpu.memory_space<vmem>>, vector<8x256xf32>
      %cst_12 = arith.constant dense<0.000000e+00> : vector<256xf32>
      %20 = vector.multi_reduction <add>, %19, %cst_12 [0] : vector<8x256xf32> to vector<256xf32>
      %21 = vector.shape_cast %20 : vector<256xf32> to vector<1x256xf32>
      %cst_13 = arith.constant 2.500000e-01 : f32
      %22 = vector.broadcast %cst_13 : f32 to vector<1x256xf32>
      %23 = arith.mulf %21, %22 : vector<1x256xf32>
      %c0_14 = arith.constant 0 : index
      %c0_15 = arith.constant 0 : index
      %24 = vector.load %arg6[%c0_14, %c0_15] : memref<8x256xf32, #tpu.memory_space<vmem>>, vector<8x256xf32>
      %cst_16 = arith.constant dense<0xFF800000> : vector<256xf32>
      %25 = vector.multi_reduction <maximumf>, %24, %cst_16 [0] : vector<8x256xf32> to vector<256xf32>
      %26 = vector.shape_cast %25 : vector<256xf32> to vector<1x256xf32>
      %cst_17 = arith.constant 0.000000e+00 : f32
      %27 = vector.broadcast %cst_17 : f32 to vector<1x51xf32>
      %28 = tpu.concatenate %27, %23, %27 in 1 : vector<1x51xf32>, vector<1x256xf32>, vector<1x51xf32> -> vector<1x358xf32>
      %29 = tpu.concatenate %27, %26, %27 in 1 : vector<1x51xf32>, vector<1x256xf32>, vector<1x51xf32> -> vector<1x358xf32>
      %30 = tpu.iota {dimensions = array<i32: 1>} : vector<1x256xi32>
      %c16_i32 = arith.constant 16 : i32
      %c0_i32_18 = arith.constant 0 : i32
      %31 = arith.cmpi eq, %c16_i32, %c0_i32_18 : i32
      %c1_i32 = arith.constant 1 : i32
      %32 = arith.select %31, %c1_i32, %c16_i32 : i32
      %33 = vector.broadcast %32 : i32 to vector<1x256xi32>
      %34 = arith.remsi %30, %33 : vector<1x256xi32>
      %c0_i32_19 = arith.constant 0 : i32
      %35 = vector.broadcast %c0_i32_19 : i32 to vector<1x256xi32>
      %36 = arith.cmpi ne, %34, %35 : vector<1x256xi32>
      %c0_i32_20 = arith.constant 0 : i32
      %37 = vector.broadcast %c0_i32_20 : i32 to vector<1x256xi32>
      %38 = arith.cmpi slt, %34, %37 : vector<1x256xi32>
      %c0_i32_21 = arith.constant 0 : i32
      %39 = arith.cmpi slt, %32, %c0_i32_21 : i32
      %40 = vector.broadcast %39 : i1 to vector<1x256xi1>
      %41 = vector.broadcast %40 : vector<1x256xi1> to vector<1x256xi1>
      %42 = arith.xori %38, %41 : vector<1x256xi1>
      %43 = arith.andi %42, %36 : vector<1x256xi1>
      %44 = vector.broadcast %32 : i32 to vector<1x256xi32>
      %45 = arith.addi %34, %44 : vector<1x256xi32>
      %46 = arith.select %43, %45, %34 : vector<1x256xi1>, vector<1x256xi32>
      %cst_22 = arith.constant 0.000000e+00 : f32
      %47 = vector.broadcast %cst_22 : f32 to vector<1x256xf32>
      %c0_23 = arith.constant 0 : index
      %48 = memref.load %arg2[%c0_23] : memref<98xf32, #tpu.memory_space<smem>>
      %c49 = arith.constant 49 : index
      %49 = memref.load %arg2[%c49] : memref<98xf32, #tpu.memory_space<smem>>
      %50 = vector.extract_strided_slice %28 {offsets = [0, 0], sizes = [1, 256], strides = [1, 1]} : vector<1x358xf32> to vector<1x256xf32>
      %51 = vector.broadcast %48 : f32 to vector<1x256xf32>
      %52 = arith.mulf %51, %50 : vector<1x256xf32>
      %53 = arith.addf %47, %52 : vector<1x256xf32>
      %54 = vector.extract_strided_slice %29 {offsets = [0, 0], sizes = [1, 256], strides = [1, 1]} : vector<1x358xf32> to vector<1x256xf32>
      %55 = vector.broadcast %49 : f32 to vector<1x256xf32>
      %56 = arith.mulf %55, %54 : vector<1x256xf32>
      %57 = arith.addf %53, %56 : vector<1x256xf32>
      %c7 = arith.constant 7 : index
      %58 = memref.load %arg2[%c7] : memref<98xf32, #tpu.memory_space<smem>>
      %c56 = arith.constant 56 : index
      %59 = memref.load %arg2[%c56] : memref<98xf32, #tpu.memory_space<smem>>
      %60 = vector.extract_strided_slice %28 {offsets = [0, 16], sizes = [1, 256], strides = [1, 1]} : vector<1x358xf32> to vector<1x256xf32>
      %61 = vector.broadcast %58 : f32 to vector<1x256xf32>
      %62 = arith.mulf %61, %60 : vector<1x256xf32>
      %63 = arith.addf %57, %62 : vector<1x256xf32>
      %64 = vector.extract_strided_slice %29 {offsets = [0, 16], sizes = [1, 256], strides = [1, 1]} : vector<1x358xf32> to vector<1x256xf32>
      %65 = vector.broadcast %59 : f32 to vector<1x256xf32>
      %66 = arith.mulf %65, %64 : vector<1x256xf32>
      %67 = arith.addf %63, %66 : vector<1x256xf32>
      %c14 = arith.constant 14 : index
      %68 = memref.load %arg2[%c14] : memref<98xf32, #tpu.memory_space<smem>>
      %c63 = arith.constant 63 : index
      %69 = memref.load %arg2[%c63] : memref<98xf32, #tpu.memory_space<smem>>
      %70 = vector.extract_strided_slice %28 {offsets = [0, 32], sizes = [1, 256], strides = [1, 1]} : vector<1x358xf32> to vector<1x256xf32>
      %71 = vector.broadcast %68 : f32 to vector<1x256xf32>
      %72 = arith.mulf %71, %70 : vector<1x256xf32>
      %73 = arith.addf %67, %72 : vector<1x256xf32>
      %74 = vector.extract_strided_slice %29 {offsets = [0, 32], sizes = [1, 256], strides = [1, 1]} : vector<1x358xf32> to vector<1x256xf32>
      %75 = vector.broadcast %69 : f32 to vector<1x256xf32>
      %76 = arith.mulf %75, %74 : vector<1x256xf32>
      %77 = arith.addf %73, %76 : vector<1x256xf32>
      %c21 = arith.constant 21 : index
      %78 = memref.load %arg2[%c21] : memref<98xf32, #tpu.memory_space<smem>>
      %c70 = arith.constant 70 : index
      %79 = memref.load %arg2[%c70] : memref<98xf32, #tpu.memory_space<smem>>
      %80 = vector.extract_strided_slice %28 {offsets = [0, 48], sizes = [1, 256], strides = [1, 1]} : vector<1x358xf32> to vector<1x256xf32>
      %81 = vector.broadcast %78 : f32 to vector<1x256xf32>
      %82 = arith.mulf %81, %80 : vector<1x256xf32>
      %83 = arith.addf %77, %82 : vector<1x256xf32>
      %84 = vector.extract_strided_slice %29 {offsets = [0, 48], sizes = [1, 256], strides = [1, 1]} : vector<1x358xf32> to vector<1x256xf32>
      %85 = vector.broadcast %79 : f32 to vector<1x256xf32>
      %86 = arith.mulf %85, %84 : vector<1x256xf32>
      %87 = arith.addf %83, %86 : vector<1x256xf32>
      %c28 = arith.constant 28 : index
      %88 = memref.load %arg2[%c28] : memref<98xf32, #tpu.memory_space<smem>>
      %c77 = arith.constant 77 : index
      %89 = memref.load %arg2[%c77] : memref<98xf32, #tpu.memory_space<smem>>
      %90 = vector.extract_strided_slice %28 {offsets = [0, 64], sizes = [1, 256], strides = [1, 1]} : vector<1x358xf32> to vector<1x256xf32>
      %91 = vector.broadcast %88 : f32 to vector<1x256xf32>
      %92 = arith.mulf %91, %90 : vector<1x256xf32>
      %93 = arith.addf %87, %92 : vector<1x256xf32>
      %94 = vector.extract_strided_slice %29 {offsets = [0, 64], sizes = [1, 256], strides = [1, 1]} : vector<1x358xf32> to vector<1x256xf32>
      %95 = vector.broadcast %89 : f32 to vector<1x256xf32>
      %96 = arith.mulf %95, %94 : vector<1x256xf32>
      %97 = arith.addf %93, %96 : vector<1x256xf32>
      %c35 = arith.constant 35 : index
      %98 = memref.load %arg2[%c35] : memref<98xf32, #tpu.memory_space<smem>>
      %c84 = arith.constant 84 : index
      %99 = memref.load %arg2[%c84] : memref<98xf32, #tpu.memory_space<smem>>
      %100 = vector.extract_strided_slice %28 {offsets = [0, 80], sizes = [1, 256], strides = [1, 1]} : vector<1x358xf32> to vector<1x256xf32>
      %101 = vector.broadcast %98 : f32 to vector<1x256xf32>
      %102 = arith.mulf %101, %100 : vector<1x256xf32>
      %103 = arith.addf %97, %102 : vector<1x256xf32>
      %104 = vector.extract_strided_slice %29 {offsets = [0, 80], sizes = [1, 256], strides = [1, 1]} : vector<1x358xf32> to vector<1x256xf32>
      %105 = vector.broadcast %99 : f32 to vector<1x256xf32>
      %106 = arith.mulf %105, %104 : vector<1x256xf32>
      %107 = arith.addf %103, %106 : vector<1x256xf32>
      %c42 = arith.constant 42 : index
      %108 = memref.load %arg2[%c42] : memref<98xf32, #tpu.memory_space<smem>>
      %c91 = arith.constant 91 : index
      %109 = memref.load %arg2[%c91] : memref<98xf32, #tpu.memory_space<smem>>
      %110 = vector.extract_strided_slice %28 {offsets = [0, 96], sizes = [1, 256], strides = [1, 1]} : vector<1x358xf32> to vector<1x256xf32>
      %111 = vector.broadcast %108 : f32 to vector<1x256xf32>
      %112 = arith.mulf %111, %110 : vector<1x256xf32>
      %113 = arith.addf %107, %112 : vector<1x256xf32>
      %114 = vector.extract_strided_slice %29 {offsets = [0, 96], sizes = [1, 256], strides = [1, 1]} : vector<1x358xf32> to vector<1x256xf32>
      %115 = vector.broadcast %109 : f32 to vector<1x256xf32>
      %116 = arith.mulf %115, %114 : vector<1x256xf32>
      %117 = arith.addf %113, %116 : vector<1x256xf32>
      %c3_i32 = arith.constant 3 : i32
      %118 = vector.broadcast %c3_i32 : i32 to vector<1x256xi32>
      %119 = arith.cmpi sge, %46, %118 : vector<1x256xi32>
      %c19_i32 = arith.constant 19 : i32
      %120 = vector.broadcast %c19_i32 : i32 to vector<1x256xi32>
      %121 = arith.cmpi slt, %46, %120 : vector<1x256xi32>
      %122 = arith.andi %119, %121 : vector<1x256xi1>
      %cst_24 = arith.constant 0.000000e+00 : f32
      %123 = vector.broadcast %cst_24 : f32 to vector<1x256xf32>
      %124 = arith.select %122, %117, %123 : vector<1x256xi1>, vector<1x256xf32>
      %cst_25 = arith.constant 0.000000e+00 : f32
      %125 = vector.broadcast %cst_25 : f32 to vector<1x256xf32>
      %c1 = arith.constant 1 : index
      %126 = memref.load %arg2[%c1] : memref<98xf32, #tpu.memory_space<smem>>
      %c50 = arith.constant 50 : index
      %127 = memref.load %arg2[%c50] : memref<98xf32, #tpu.memory_space<smem>>
      %128 = vector.extract_strided_slice %28 {offsets = [0, 1], sizes = [1, 256], strides = [1, 1]} : vector<1x358xf32> to vector<1x256xf32>
      %129 = vector.broadcast %126 : f32 to vector<1x256xf32>
      %130 = arith.mulf %129, %128 : vector<1x256xf32>
      %131 = arith.addf %125, %130 : vector<1x256xf32>
      %132 = vector.extract_strided_slice %29 {offsets = [0, 1], sizes = [1, 256], strides = [1, 1]} : vector<1x358xf32> to vector<1x256xf32>
      %133 = vector.broadcast %127 : f32 to vector<1x256xf32>
      %134 = arith.mulf %133, %132 : vector<1x256xf32>
      %135 = arith.addf %131, %134 : vector<1x256xf32>
      %c8 = arith.constant 8 : index
      %136 = memref.load %arg2[%c8] : memref<98xf32, #tpu.memory_space<smem>>
      %c57 = arith.constant 57 : index
      %137 = memref.load %arg2[%c57] : memref<98xf32, #tpu.memory_space<smem>>
      %138 = vector.extract_strided_slice %28 {offsets = [0, 17], sizes = [1, 256], strides = [1, 1]} : vector<1x358xf32> to vector<1x256xf32>
      %139 = vector.broadcast %136 : f32 to vector<1x256xf32>
      %140 = arith.mulf %139, %138 : vector<1x256xf32>
      %141 = arith.addf %135, %140 : vector<1x256xf32>
      %142 = vector.extract_strided_slice %29 {offsets = [0, 17], sizes = [1, 256], strides = [1, 1]} : vector<1x358xf32> to vector<1x256xf32>
      %143 = vector.broadcast %137 : f32 to vector<1x256xf32>
      %144 = arith.mulf %143, %142 : vector<1x256xf32>
      %145 = arith.addf %141, %144 : vector<1x256xf32>
      %c15 = arith.constant 15 : index
      %146 = memref.load %arg2[%c15] : memref<98xf32, #tpu.memory_space<smem>>
      %c64 = arith.constant 64 : index
      %147 = memref.load %arg2[%c64] : memref<98xf32, #tpu.memory_space<smem>>
      %148 = vector.extract_strided_slice %28 {offsets = [0, 33], sizes = [1, 256], strides = [1, 1]} : vector<1x358xf32> to vector<1x256xf32>
      %149 = vector.broadcast %146 : f32 to vector<1x256xf32>
      %150 = arith.mulf %149, %148 : vector<1x256xf32>
      %151 = arith.addf %145, %150 : vector<1x256xf32>
      %152 = vector.extract_strided_slice %29 {offsets = [0, 33], sizes = [1, 256], strides = [1, 1]} : vector<1x358xf32> to vector<1x256xf32>
      %153 = vector.broadcast %147 : f32 to vector<1x256xf32>
      %154 = arith.mulf %153, %152 : vector<1x256xf32>
      %155 = arith.addf %151, %154 : vector<1x256xf32>
      %c22 = arith.constant 22 : index
      %156 = memref.load %arg2[%c22] : memref<98xf32, #tpu.memory_space<smem>>
      %c71 = arith.constant 71 : index
      %157 = memref.load %arg2[%c71] : memref<98xf32, #tpu.memory_space<smem>>
      %158 = vector.extract_strided_slice %28 {offsets = [0, 49], sizes = [1, 256], strides = [1, 1]} : vector<1x358xf32> to vector<1x256xf32>
      %159 = vector.broadcast %156 : f32 to vector<1x256xf32>
      %160 = arith.mulf %159, %158 : vector<1x256xf32>
      %161 = arith.addf %155, %160 : vector<1x256xf32>
      %162 = vector.extract_strided_slice %29 {offsets = [0, 49], sizes = [1, 256], strides = [1, 1]} : vector<1x358xf32> to vector<1x256xf32>
      %163 = vector.broadcast %157 : f32 to vector<1x256xf32>
      %164 = arith.mulf %163, %162 : vector<1x256xf32>
      %165 = arith.addf %161, %164 : vector<1x256xf32>
      %c29 = arith.constant 29 : index
      %166 = memref.load %arg2[%c29] : memref<98xf32, #tpu.memory_space<smem>>
      %c78 = arith.constant 78 : index
      %167 = memref.load %arg2[%c78] : memref<98xf32, #tpu.memory_space<smem>>
      %168 = vector.extract_strided_slice %28 {offsets = [0, 65], sizes = [1, 256], strides = [1, 1]} : vector<1x358xf32> to vector<1x256xf32>
      %169 = vector.broadcast %166 : f32 to vector<1x256xf32>
      %170 = arith.mulf %169, %168 : vector<1x256xf32>
      %171 = arith.addf %165, %170 : vector<1x256xf32>
      %172 = vector.extract_strided_slice %29 {offsets = [0, 65], sizes = [1, 256], strides = [1, 1]} : vector<1x358xf32> to vector<1x256xf32>
      %173 = vector.broadcast %167 : f32 to vector<1x256xf32>
      %174 = arith.mulf %173, %172 : vector<1x256xf32>
      %175 = arith.addf %171, %174 : vector<1x256xf32>
      %c36 = arith.constant 36 : index
      %176 = memref.load %arg2[%c36] : memref<98xf32, #tpu.memory_space<smem>>
      %c85 = arith.constant 85 : index
      %177 = memref.load %arg2[%c85] : memref<98xf32, #tpu.memory_space<smem>>
      %178 = vector.extract_strided_slice %28 {offsets = [0, 81], sizes = [1, 256], strides = [1, 1]} : vector<1x358xf32> to vector<1x256xf32>
      %179 = vector.broadcast %176 : f32 to vector<1x256xf32>
      %180 = arith.mulf %179, %178 : vector<1x256xf32>
      %181 = arith.addf %175, %180 : vector<1x256xf32>
      %182 = vector.extract_strided_slice %29 {offsets = [0, 81], sizes = [1, 256], strides = [1, 1]} : vector<1x358xf32> to vector<1x256xf32>
      %183 = vector.broadcast %177 : f32 to vector<1x256xf32>
      %184 = arith.mulf %183, %182 : vector<1x256xf32>
      %185 = arith.addf %181, %184 : vector<1x256xf32>
      %c43 = arith.constant 43 : index
      %186 = memref.load %arg2[%c43] : memref<98xf32, #tpu.memory_space<smem>>
      %c92 = arith.constant 92 : index
      %187 = memref.load %arg2[%c92] : memref<98xf32, #tpu.memory_space<smem>>
      %188 = vector.extract_strided_slice %28 {offsets = [0, 97], sizes = [1, 256], strides = [1, 1]} : vector<1x358xf32> to vector<1x256xf32>
      %189 = vector.broadcast %186 : f32 to vector<1x256xf32>
      %190 = arith.mulf %189, %188 : vector<1x256xf32>
      %191 = arith.addf %185, %190 : vector<1x256xf32>
      %192 = vector.extract_strided_slice %29 {offsets = [0, 97], sizes = [1, 256], strides = [1, 1]} : vector<1x358xf32> to vector<1x256xf32>
      %193 = vector.broadcast %187 : f32 to vector<1x256xf32>
      %194 = arith.mulf %193, %192 : vector<1x256xf32>
      %195 = arith.addf %191, %194 : vector<1x256xf32>
      %c2_i32 = arith.constant 2 : i32
      %196 = vector.broadcast %c2_i32 : i32 to vector<1x256xi32>
      %197 = arith.cmpi sge, %46, %196 : vector<1x256xi32>
      %c18_i32 = arith.constant 18 : i32
      %198 = vector.broadcast %c18_i32 : i32 to vector<1x256xi32>
      %199 = arith.cmpi slt, %46, %198 : vector<1x256xi32>
      %200 = arith.andi %197, %199 : vector<1x256xi1>
      %cst_26 = arith.constant 0.000000e+00 : f32
      %201 = vector.broadcast %cst_26 : f32 to vector<1x256xf32>
      %202 = arith.select %200, %195, %201 : vector<1x256xi1>, vector<1x256xf32>
      %cst_27 = arith.constant 0.000000e+00 : f32
      %203 = vector.broadcast %cst_27 : f32 to vector<1x256xf32>
      %c2 = arith.constant 2 : index
      %204 = memref.load %arg2[%c2] : memref<98xf32, #tpu.memory_space<smem>>
      %c51 = arith.constant 51 : index
      %205 = memref.load %arg2[%c51] : memref<98xf32, #tpu.memory_space<smem>>
      %206 = vector.extract_strided_slice %28 {offsets = [0, 2], sizes = [1, 256], strides = [1, 1]} : vector<1x358xf32> to vector<1x256xf32>
      %207 = vector.broadcast %204 : f32 to vector<1x256xf32>
      %208 = arith.mulf %207, %206 : vector<1x256xf32>
      %209 = arith.addf %203, %208 : vector<1x256xf32>
      %210 = vector.extract_strided_slice %29 {offsets = [0, 2], sizes = [1, 256], strides = [1, 1]} : vector<1x358xf32> to vector<1x256xf32>
      %211 = vector.broadcast %205 : f32 to vector<1x256xf32>
      %212 = arith.mulf %211, %210 : vector<1x256xf32>
      %213 = arith.addf %209, %212 : vector<1x256xf32>
      %c9 = arith.constant 9 : index
      %214 = memref.load %arg2[%c9] : memref<98xf32, #tpu.memory_space<smem>>
      %c58 = arith.constant 58 : index
      %215 = memref.load %arg2[%c58] : memref<98xf32, #tpu.memory_space<smem>>
      %216 = vector.extract_strided_slice %28 {offsets = [0, 18], sizes = [1, 256], strides = [1, 1]} : vector<1x358xf32> to vector<1x256xf32>
      %217 = vector.broadcast %214 : f32 to vector<1x256xf32>
      %218 = arith.mulf %217, %216 : vector<1x256xf32>
      %219 = arith.addf %213, %218 : vector<1x256xf32>
      %220 = vector.extract_strided_slice %29 {offsets = [0, 18], sizes = [1, 256], strides = [1, 1]} : vector<1x358xf32> to vector<1x256xf32>
      %221 = vector.broadcast %215 : f32 to vector<1x256xf32>
      %222 = arith.mulf %221, %220 : vector<1x256xf32>
      %223 = arith.addf %219, %222 : vector<1x256xf32>
      %c16 = arith.constant 16 : index
      %224 = memref.load %arg2[%c16] : memref<98xf32, #tpu.memory_space<smem>>
      %c65 = arith.constant 65 : index
      %225 = memref.load %arg2[%c65] : memref<98xf32, #tpu.memory_space<smem>>
      %226 = vector.extract_strided_slice %28 {offsets = [0, 34], sizes = [1, 256], strides = [1, 1]} : vector<1x358xf32> to vector<1x256xf32>
      %227 = vector.broadcast %224 : f32 to vector<1x256xf32>
      %228 = arith.mulf %227, %226 : vector<1x256xf32>
      %229 = arith.addf %223, %228 : vector<1x256xf32>
      %230 = vector.extract_strided_slice %29 {offsets = [0, 34], sizes = [1, 256], strides = [1, 1]} : vector<1x358xf32> to vector<1x256xf32>
      %231 = vector.broadcast %225 : f32 to vector<1x256xf32>
      %232 = arith.mulf %231, %230 : vector<1x256xf32>
      %233 = arith.addf %229, %232 : vector<1x256xf32>
      %c23 = arith.constant 23 : index
      %234 = memref.load %arg2[%c23] : memref<98xf32, #tpu.memory_space<smem>>
      %c72 = arith.constant 72 : index
      %235 = memref.load %arg2[%c72] : memref<98xf32, #tpu.memory_space<smem>>
      %236 = vector.extract_strided_slice %28 {offsets = [0, 50], sizes = [1, 256], strides = [1, 1]} : vector<1x358xf32> to vector<1x256xf32>
      %237 = vector.broadcast %234 : f32 to vector<1x256xf32>
      %238 = arith.mulf %237, %236 : vector<1x256xf32>
      %239 = arith.addf %233, %238 : vector<1x256xf32>
      %240 = vector.extract_strided_slice %29 {offsets = [0, 50], sizes = [1, 256], strides = [1, 1]} : vector<1x358xf32> to vector<1x256xf32>
      %241 = vector.broadcast %235 : f32 to vector<1x256xf32>
      %242 = arith.mulf %241, %240 : vector<1x256xf32>
      %243 = arith.addf %239, %242 : vector<1x256xf32>
      %c30 = arith.constant 30 : index
      %244 = memref.load %arg2[%c30] : memref<98xf32, #tpu.memory_space<smem>>
      %c79 = arith.constant 79 : index
      %245 = memref.load %arg2[%c79] : memref<98xf32, #tpu.memory_space<smem>>
      %246 = vector.extract_strided_slice %28 {offsets = [0, 66], sizes = [1, 256], strides = [1, 1]} : vector<1x358xf32> to vector<1x256xf32>
      %247 = vector.broadcast %244 : f32 to vector<1x256xf32>
      %248 = arith.mulf %247, %246 : vector<1x256xf32>
      %249 = arith.addf %243, %248 : vector<1x256xf32>
      %250 = vector.extract_strided_slice %29 {offsets = [0, 66], sizes = [1, 256], strides = [1, 1]} : vector<1x358xf32> to vector<1x256xf32>
      %251 = vector.broadcast %245 : f32 to vector<1x256xf32>
      %252 = arith.mulf %251, %250 : vector<1x256xf32>
      %253 = arith.addf %249, %252 : vector<1x256xf32>
      %c37 = arith.constant 37 : index
      %254 = memref.load %arg2[%c37] : memref<98xf32, #tpu.memory_space<smem>>
      %c86 = arith.constant 86 : index
      %255 = memref.load %arg2[%c86] : memref<98xf32, #tpu.memory_space<smem>>
      %256 = vector.extract_strided_slice %28 {offsets = [0, 82], sizes = [1, 256], strides = [1, 1]} : vector<1x358xf32> to vector<1x256xf32>
      %257 = vector.broadcast %254 : f32 to vector<1x256xf32>
      %258 = arith.mulf %257, %256 : vector<1x256xf32>
      %259 = arith.addf %253, %258 : vector<1x256xf32>
      %260 = vector.extract_strided_slice %29 {offsets = [0, 82], sizes = [1, 256], strides = [1, 1]} : vector<1x358xf32> to vector<1x256xf32>
      %261 = vector.broadcast %255 : f32 to vector<1x256xf32>
      %262 = arith.mulf %261, %260 : vector<1x256xf32>
      %263 = arith.addf %259, %262 : vector<1x256xf32>
      %c44 = arith.constant 44 : index
      %264 = memref.load %arg2[%c44] : memref<98xf32, #tpu.memory_space<smem>>
      %c93 = arith.constant 93 : index
      %265 = memref.load %arg2[%c93] : memref<98xf32, #tpu.memory_space<smem>>
      %266 = vector.extract_strided_slice %28 {offsets = [0, 98], sizes = [1, 256], strides = [1, 1]} : vector<1x358xf32> to vector<1x256xf32>
      %267 = vector.broadcast %264 : f32 to vector<1x256xf32>
      %268 = arith.mulf %267, %266 : vector<1x256xf32>
      %269 = arith.addf %263, %268 : vector<1x256xf32>
      %270 = vector.extract_strided_slice %29 {offsets = [0, 98], sizes = [1, 256], strides = [1, 1]} : vector<1x358xf32> to vector<1x256xf32>
      %271 = vector.broadcast %265 : f32 to vector<1x256xf32>
      %272 = arith.mulf %271, %270 : vector<1x256xf32>
      %273 = arith.addf %269, %272 : vector<1x256xf32>
      %c1_i32_28 = arith.constant 1 : i32
      %274 = vector.broadcast %c1_i32_28 : i32 to vector<1x256xi32>
      %275 = arith.cmpi sge, %46, %274 : vector<1x256xi32>
      %c17_i32 = arith.constant 17 : i32
      %276 = vector.broadcast %c17_i32 : i32 to vector<1x256xi32>
      %277 = arith.cmpi slt, %46, %276 : vector<1x256xi32>
      %278 = arith.andi %275, %277 : vector<1x256xi1>
      %cst_29 = arith.constant 0.000000e+00 : f32
      %279 = vector.broadcast %cst_29 : f32 to vector<1x256xf32>
      %280 = arith.select %278, %273, %279 : vector<1x256xi1>, vector<1x256xf32>
      %cst_30 = arith.constant 0.000000e+00 : f32
      %281 = vector.broadcast %cst_30 : f32 to vector<1x256xf32>
      %c3 = arith.constant 3 : index
      %282 = memref.load %arg2[%c3] : memref<98xf32, #tpu.memory_space<smem>>
      %c52 = arith.constant 52 : index
      %283 = memref.load %arg2[%c52] : memref<98xf32, #tpu.memory_space<smem>>
      %284 = vector.extract_strided_slice %28 {offsets = [0, 3], sizes = [1, 256], strides = [1, 1]} : vector<1x358xf32> to vector<1x256xf32>
      %285 = vector.broadcast %282 : f32 to vector<1x256xf32>
      %286 = arith.mulf %285, %284 : vector<1x256xf32>
      %287 = arith.addf %281, %286 : vector<1x256xf32>
      %288 = vector.extract_strided_slice %29 {offsets = [0, 3], sizes = [1, 256], strides = [1, 1]} : vector<1x358xf32> to vector<1x256xf32>
      %289 = vector.broadcast %283 : f32 to vector<1x256xf32>
      %290 = arith.mulf %289, %288 : vector<1x256xf32>
      %291 = arith.addf %287, %290 : vector<1x256xf32>
      %c10 = arith.constant 10 : index
      %292 = memref.load %arg2[%c10] : memref<98xf32, #tpu.memory_space<smem>>
      %c59 = arith.constant 59 : index
      %293 = memref.load %arg2[%c59] : memref<98xf32, #tpu.memory_space<smem>>
      %294 = vector.extract_strided_slice %28 {offsets = [0, 19], sizes = [1, 256], strides = [1, 1]} : vector<1x358xf32> to vector<1x256xf32>
      %295 = vector.broadcast %292 : f32 to vector<1x256xf32>
      %296 = arith.mulf %295, %294 : vector<1x256xf32>
      %297 = arith.addf %291, %296 : vector<1x256xf32>
      %298 = vector.extract_strided_slice %29 {offsets = [0, 19], sizes = [1, 256], strides = [1, 1]} : vector<1x358xf32> to vector<1x256xf32>
      %299 = vector.broadcast %293 : f32 to vector<1x256xf32>
      %300 = arith.mulf %299, %298 : vector<1x256xf32>
      %301 = arith.addf %297, %300 : vector<1x256xf32>
      %c17 = arith.constant 17 : index
      %302 = memref.load %arg2[%c17] : memref<98xf32, #tpu.memory_space<smem>>
      %c66 = arith.constant 66 : index
      %303 = memref.load %arg2[%c66] : memref<98xf32, #tpu.memory_space<smem>>
      %304 = vector.extract_strided_slice %28 {offsets = [0, 35], sizes = [1, 256], strides = [1, 1]} : vector<1x358xf32> to vector<1x256xf32>
      %305 = vector.broadcast %302 : f32 to vector<1x256xf32>
      %306 = arith.mulf %305, %304 : vector<1x256xf32>
      %307 = arith.addf %301, %306 : vector<1x256xf32>
      %308 = vector.extract_strided_slice %29 {offsets = [0, 35], sizes = [1, 256], strides = [1, 1]} : vector<1x358xf32> to vector<1x256xf32>
      %309 = vector.broadcast %303 : f32 to vector<1x256xf32>
      %310 = arith.mulf %309, %308 : vector<1x256xf32>
      %311 = arith.addf %307, %310 : vector<1x256xf32>
      %c24 = arith.constant 24 : index
      %312 = memref.load %arg2[%c24] : memref<98xf32, #tpu.memory_space<smem>>
      %c73 = arith.constant 73 : index
      %313 = memref.load %arg2[%c73] : memref<98xf32, #tpu.memory_space<smem>>
      %314 = vector.extract_strided_slice %28 {offsets = [0, 51], sizes = [1, 256], strides = [1, 1]} : vector<1x358xf32> to vector<1x256xf32>
      %315 = vector.broadcast %312 : f32 to vector<1x256xf32>
      %316 = arith.mulf %315, %314 : vector<1x256xf32>
      %317 = arith.addf %311, %316 : vector<1x256xf32>
      %318 = vector.extract_strided_slice %29 {offsets = [0, 51], sizes = [1, 256], strides = [1, 1]} : vector<1x358xf32> to vector<1x256xf32>
      %319 = vector.broadcast %313 : f32 to vector<1x256xf32>
      %320 = arith.mulf %319, %318 : vector<1x256xf32>
      %321 = arith.addf %317, %320 : vector<1x256xf32>
      %c31 = arith.constant 31 : index
      %322 = memref.load %arg2[%c31] : memref<98xf32, #tpu.memory_space<smem>>
      %c80 = arith.constant 80 : index
      %323 = memref.load %arg2[%c80] : memref<98xf32, #tpu.memory_space<smem>>
      %324 = vector.extract_strided_slice %28 {offsets = [0, 67], sizes = [1, 256], strides = [1, 1]} : vector<1x358xf32> to vector<1x256xf32>
      %325 = vector.broadcast %322 : f32 to vector<1x256xf32>
      %326 = arith.mulf %325, %324 : vector<1x256xf32>
      %327 = arith.addf %321, %326 : vector<1x256xf32>
      %328 = vector.extract_strided_slice %29 {offsets = [0, 67], sizes = [1, 256], strides = [1, 1]} : vector<1x358xf32> to vector<1x256xf32>
      %329 = vector.broadcast %323 : f32 to vector<1x256xf32>
      %330 = arith.mulf %329, %328 : vector<1x256xf32>
      %331 = arith.addf %327, %330 : vector<1x256xf32>
      %c38 = arith.constant 38 : index
      %332 = memref.load %arg2[%c38] : memref<98xf32, #tpu.memory_space<smem>>
      %c87 = arith.constant 87 : index
      %333 = memref.load %arg2[%c87] : memref<98xf32, #tpu.memory_space<smem>>
      %334 = vector.extract_strided_slice %28 {offsets = [0, 83], sizes = [1, 256], strides = [1, 1]} : vector<1x358xf32> to vector<1x256xf32>
      %335 = vector.broadcast %332 : f32 to vector<1x256xf32>
      %336 = arith.mulf %335, %334 : vector<1x256xf32>
      %337 = arith.addf %331, %336 : vector<1x256xf32>
      %338 = vector.extract_strided_slice %29 {offsets = [0, 83], sizes = [1, 256], strides = [1, 1]} : vector<1x358xf32> to vector<1x256xf32>
      %339 = vector.broadcast %333 : f32 to vector<1x256xf32>
      %340 = arith.mulf %339, %338 : vector<1x256xf32>
      %341 = arith.addf %337, %340 : vector<1x256xf32>
      %c45 = arith.constant 45 : index
      %342 = memref.load %arg2[%c45] : memref<98xf32, #tpu.memory_space<smem>>
      %c94 = arith.constant 94 : index
      %343 = memref.load %arg2[%c94] : memref<98xf32, #tpu.memory_space<smem>>
      %344 = vector.extract_strided_slice %28 {offsets = [0, 99], sizes = [1, 256], strides = [1, 1]} : vector<1x358xf32> to vector<1x256xf32>
      %345 = vector.broadcast %342 : f32 to vector<1x256xf32>
      %346 = arith.mulf %345, %344 : vector<1x256xf32>
      %347 = arith.addf %341, %346 : vector<1x256xf32>
      %348 = vector.extract_strided_slice %29 {offsets = [0, 99], sizes = [1, 256], strides = [1, 1]} : vector<1x358xf32> to vector<1x256xf32>
      %349 = vector.broadcast %343 : f32 to vector<1x256xf32>
      %350 = arith.mulf %349, %348 : vector<1x256xf32>
      %351 = arith.addf %347, %350 : vector<1x256xf32>
      %cst_31 = arith.constant 0.000000e+00 : f32
      %352 = vector.broadcast %cst_31 : f32 to vector<1x256xf32>
      %c4 = arith.constant 4 : index
      %353 = memref.load %arg2[%c4] : memref<98xf32, #tpu.memory_space<smem>>
      %c53 = arith.constant 53 : index
      %354 = memref.load %arg2[%c53] : memref<98xf32, #tpu.memory_space<smem>>
      %355 = vector.extract_strided_slice %28 {offsets = [0, 4], sizes = [1, 256], strides = [1, 1]} : vector<1x358xf32> to vector<1x256xf32>
      %356 = vector.broadcast %353 : f32 to vector<1x256xf32>
      %357 = arith.mulf %356, %355 : vector<1x256xf32>
      %358 = arith.addf %352, %357 : vector<1x256xf32>
      %359 = vector.extract_strided_slice %29 {offsets = [0, 4], sizes = [1, 256], strides = [1, 1]} : vector<1x358xf32> to vector<1x256xf32>
      %360 = vector.broadcast %354 : f32 to vector<1x256xf32>
      %361 = arith.mulf %360, %359 : vector<1x256xf32>
      %362 = arith.addf %358, %361 : vector<1x256xf32>
      %c11 = arith.constant 11 : index
      %363 = memref.load %arg2[%c11] : memref<98xf32, #tpu.memory_space<smem>>
      %c60 = arith.constant 60 : index
      %364 = memref.load %arg2[%c60] : memref<98xf32, #tpu.memory_space<smem>>
      %365 = vector.extract_strided_slice %28 {offsets = [0, 20], sizes = [1, 256], strides = [1, 1]} : vector<1x358xf32> to vector<1x256xf32>
      %366 = vector.broadcast %363 : f32 to vector<1x256xf32>
      %367 = arith.mulf %366, %365 : vector<1x256xf32>
      %368 = arith.addf %362, %367 : vector<1x256xf32>
      %369 = vector.extract_strided_slice %29 {offsets = [0, 20], sizes = [1, 256], strides = [1, 1]} : vector<1x358xf32> to vector<1x256xf32>
      %370 = vector.broadcast %364 : f32 to vector<1x256xf32>
      %371 = arith.mulf %370, %369 : vector<1x256xf32>
      %372 = arith.addf %368, %371 : vector<1x256xf32>
      %c18 = arith.constant 18 : index
      %373 = memref.load %arg2[%c18] : memref<98xf32, #tpu.memory_space<smem>>
      %c67 = arith.constant 67 : index
      %374 = memref.load %arg2[%c67] : memref<98xf32, #tpu.memory_space<smem>>
      %375 = vector.extract_strided_slice %28 {offsets = [0, 36], sizes = [1, 256], strides = [1, 1]} : vector<1x358xf32> to vector<1x256xf32>
      %376 = vector.broadcast %373 : f32 to vector<1x256xf32>
      %377 = arith.mulf %376, %375 : vector<1x256xf32>
      %378 = arith.addf %372, %377 : vector<1x256xf32>
      %379 = vector.extract_strided_slice %29 {offsets = [0, 36], sizes = [1, 256], strides = [1, 1]} : vector<1x358xf32> to vector<1x256xf32>
      %380 = vector.broadcast %374 : f32 to vector<1x256xf32>
      %381 = arith.mulf %380, %379 : vector<1x256xf32>
      %382 = arith.addf %378, %381 : vector<1x256xf32>
      %c25 = arith.constant 25 : index
      %383 = memref.load %arg2[%c25] : memref<98xf32, #tpu.memory_space<smem>>
      %c74 = arith.constant 74 : index
      %384 = memref.load %arg2[%c74] : memref<98xf32, #tpu.memory_space<smem>>
      %385 = vector.extract_strided_slice %28 {offsets = [0, 52], sizes = [1, 256], strides = [1, 1]} : vector<1x358xf32> to vector<1x256xf32>
      %386 = vector.broadcast %383 : f32 to vector<1x256xf32>
      %387 = arith.mulf %386, %385 : vector<1x256xf32>
      %388 = arith.addf %382, %387 : vector<1x256xf32>
      %389 = vector.extract_strided_slice %29 {offsets = [0, 52], sizes = [1, 256], strides = [1, 1]} : vector<1x358xf32> to vector<1x256xf32>
      %390 = vector.broadcast %384 : f32 to vector<1x256xf32>
      %391 = arith.mulf %390, %389 : vector<1x256xf32>
      %392 = arith.addf %388, %391 : vector<1x256xf32>
      %c32 = arith.constant 32 : index
      %393 = memref.load %arg2[%c32] : memref<98xf32, #tpu.memory_space<smem>>
      %c81 = arith.constant 81 : index
      %394 = memref.load %arg2[%c81] : memref<98xf32, #tpu.memory_space<smem>>
      %395 = vector.extract_strided_slice %28 {offsets = [0, 68], sizes = [1, 256], strides = [1, 1]} : vector<1x358xf32> to vector<1x256xf32>
      %396 = vector.broadcast %393 : f32 to vector<1x256xf32>
      %397 = arith.mulf %396, %395 : vector<1x256xf32>
      %398 = arith.addf %392, %397 : vector<1x256xf32>
      %399 = vector.extract_strided_slice %29 {offsets = [0, 68], sizes = [1, 256], strides = [1, 1]} : vector<1x358xf32> to vector<1x256xf32>
      %400 = vector.broadcast %394 : f32 to vector<1x256xf32>
      %401 = arith.mulf %400, %399 : vector<1x256xf32>
      %402 = arith.addf %398, %401 : vector<1x256xf32>
      %c39 = arith.constant 39 : index
      %403 = memref.load %arg2[%c39] : memref<98xf32, #tpu.memory_space<smem>>
      %c88 = arith.constant 88 : index
      %404 = memref.load %arg2[%c88] : memref<98xf32, #tpu.memory_space<smem>>
      %405 = vector.extract_strided_slice %28 {offsets = [0, 84], sizes = [1, 256], strides = [1, 1]} : vector<1x358xf32> to vector<1x256xf32>
      %406 = vector.broadcast %403 : f32 to vector<1x256xf32>
      %407 = arith.mulf %406, %405 : vector<1x256xf32>
      %408 = arith.addf %402, %407 : vector<1x256xf32>
      %409 = vector.extract_strided_slice %29 {offsets = [0, 84], sizes = [1, 256], strides = [1, 1]} : vector<1x358xf32> to vector<1x256xf32>
      %410 = vector.broadcast %404 : f32 to vector<1x256xf32>
      %411 = arith.mulf %410, %409 : vector<1x256xf32>
      %412 = arith.addf %408, %411 : vector<1x256xf32>
      %c46 = arith.constant 46 : index
      %413 = memref.load %arg2[%c46] : memref<98xf32, #tpu.memory_space<smem>>
      %c95 = arith.constant 95 : index
      %414 = memref.load %arg2[%c95] : memref<98xf32, #tpu.memory_space<smem>>
      %415 = vector.extract_strided_slice %28 {offsets = [0, 100], sizes = [1, 256], strides = [1, 1]} : vector<1x358xf32> to vector<1x256xf32>
      %416 = vector.broadcast %413 : f32 to vector<1x256xf32>
      %417 = arith.mulf %416, %415 : vector<1x256xf32>
      %418 = arith.addf %412, %417 : vector<1x256xf32>
      %419 = vector.extract_strided_slice %29 {offsets = [0, 100], sizes = [1, 256], strides = [1, 1]} : vector<1x358xf32> to vector<1x256xf32>
      %420 = vector.broadcast %414 : f32 to vector<1x256xf32>
      %421 = arith.mulf %420, %419 : vector<1x256xf32>
      %422 = arith.addf %418, %421 : vector<1x256xf32>
      %c-1_i32 = arith.constant -1 : i32
      %423 = vector.broadcast %c-1_i32 : i32 to vector<1x256xi32>
      %424 = arith.cmpi sge, %46, %423 : vector<1x256xi32>
      %c15_i32 = arith.constant 15 : i32
      %425 = vector.broadcast %c15_i32 : i32 to vector<1x256xi32>
      %426 = arith.cmpi slt, %46, %425 : vector<1x256xi32>
      %427 = arith.andi %424, %426 : vector<1x256xi1>
      %cst_32 = arith.constant 0.000000e+00 : f32
      %428 = vector.broadcast %cst_32 : f32 to vector<1x256xf32>
      %429 = arith.select %427, %422, %428 : vector<1x256xi1>, vector<1x256xf32>
      %cst_33 = arith.constant 0.000000e+00 : f32
      %430 = vector.broadcast %cst_33 : f32 to vector<1x256xf32>
      %c5 = arith.constant 5 : index
      %431 = memref.load %arg2[%c5] : memref<98xf32, #tpu.memory_space<smem>>
      %c54 = arith.constant 54 : index
      %432 = memref.load %arg2[%c54] : memref<98xf32, #tpu.memory_space<smem>>
      %433 = vector.extract_strided_slice %28 {offsets = [0, 5], sizes = [1, 256], strides = [1, 1]} : vector<1x358xf32> to vector<1x256xf32>
      %434 = vector.broadcast %431 : f32 to vector<1x256xf32>
      %435 = arith.mulf %434, %433 : vector<1x256xf32>
      %436 = arith.addf %430, %435 : vector<1x256xf32>
      %437 = vector.extract_strided_slice %29 {offsets = [0, 5], sizes = [1, 256], strides = [1, 1]} : vector<1x358xf32> to vector<1x256xf32>
      %438 = vector.broadcast %432 : f32 to vector<1x256xf32>
      %439 = arith.mulf %438, %437 : vector<1x256xf32>
      %440 = arith.addf %436, %439 : vector<1x256xf32>
      %c12 = arith.constant 12 : index
      %441 = memref.load %arg2[%c12] : memref<98xf32, #tpu.memory_space<smem>>
      %c61 = arith.constant 61 : index
      %442 = memref.load %arg2[%c61] : memref<98xf32, #tpu.memory_space<smem>>
      %443 = vector.extract_strided_slice %28 {offsets = [0, 21], sizes = [1, 256], strides = [1, 1]} : vector<1x358xf32> to vector<1x256xf32>
      %444 = vector.broadcast %441 : f32 to vector<1x256xf32>
      %445 = arith.mulf %444, %443 : vector<1x256xf32>
      %446 = arith.addf %440, %445 : vector<1x256xf32>
      %447 = vector.extract_strided_slice %29 {offsets = [0, 21], sizes = [1, 256], strides = [1, 1]} : vector<1x358xf32> to vector<1x256xf32>
      %448 = vector.broadcast %442 : f32 to vector<1x256xf32>
      %449 = arith.mulf %448, %447 : vector<1x256xf32>
      %450 = arith.addf %446, %449 : vector<1x256xf32>
      %c19 = arith.constant 19 : index
      %451 = memref.load %arg2[%c19] : memref<98xf32, #tpu.memory_space<smem>>
      %c68 = arith.constant 68 : index
      %452 = memref.load %arg2[%c68] : memref<98xf32, #tpu.memory_space<smem>>
      %453 = vector.extract_strided_slice %28 {offsets = [0, 37], sizes = [1, 256], strides = [1, 1]} : vector<1x358xf32> to vector<1x256xf32>
      %454 = vector.broadcast %451 : f32 to vector<1x256xf32>
      %455 = arith.mulf %454, %453 : vector<1x256xf32>
      %456 = arith.addf %450, %455 : vector<1x256xf32>
      %457 = vector.extract_strided_slice %29 {offsets = [0, 37], sizes = [1, 256], strides = [1, 1]} : vector<1x358xf32> to vector<1x256xf32>
      %458 = vector.broadcast %452 : f32 to vector<1x256xf32>
      %459 = arith.mulf %458, %457 : vector<1x256xf32>
      %460 = arith.addf %456, %459 : vector<1x256xf32>
      %c26 = arith.constant 26 : index
      %461 = memref.load %arg2[%c26] : memref<98xf32, #tpu.memory_space<smem>>
      %c75 = arith.constant 75 : index
      %462 = memref.load %arg2[%c75] : memref<98xf32, #tpu.memory_space<smem>>
      %463 = vector.extract_strided_slice %28 {offsets = [0, 53], sizes = [1, 256], strides = [1, 1]} : vector<1x358xf32> to vector<1x256xf32>
      %464 = vector.broadcast %461 : f32 to vector<1x256xf32>
      %465 = arith.mulf %464, %463 : vector<1x256xf32>
      %466 = arith.addf %460, %465 : vector<1x256xf32>
      %467 = vector.extract_strided_slice %29 {offsets = [0, 53], sizes = [1, 256], strides = [1, 1]} : vector<1x358xf32> to vector<1x256xf32>
      %468 = vector.broadcast %462 : f32 to vector<1x256xf32>
      %469 = arith.mulf %468, %467 : vector<1x256xf32>
      %470 = arith.addf %466, %469 : vector<1x256xf32>
      %c33 = arith.constant 33 : index
      %471 = memref.load %arg2[%c33] : memref<98xf32, #tpu.memory_space<smem>>
      %c82 = arith.constant 82 : index
      %472 = memref.load %arg2[%c82] : memref<98xf32, #tpu.memory_space<smem>>
      %473 = vector.extract_strided_slice %28 {offsets = [0, 69], sizes = [1, 256], strides = [1, 1]} : vector<1x358xf32> to vector<1x256xf32>
      %474 = vector.broadcast %471 : f32 to vector<1x256xf32>
      %475 = arith.mulf %474, %473 : vector<1x256xf32>
      %476 = arith.addf %470, %475 : vector<1x256xf32>
      %477 = vector.extract_strided_slice %29 {offsets = [0, 69], sizes = [1, 256], strides = [1, 1]} : vector<1x358xf32> to vector<1x256xf32>
      %478 = vector.broadcast %472 : f32 to vector<1x256xf32>
      %479 = arith.mulf %478, %477 : vector<1x256xf32>
      %480 = arith.addf %476, %479 : vector<1x256xf32>
      %c40 = arith.constant 40 : index
      %481 = memref.load %arg2[%c40] : memref<98xf32, #tpu.memory_space<smem>>
      %c89 = arith.constant 89 : index
      %482 = memref.load %arg2[%c89] : memref<98xf32, #tpu.memory_space<smem>>
      %483 = vector.extract_strided_slice %28 {offsets = [0, 85], sizes = [1, 256], strides = [1, 1]} : vector<1x358xf32> to vector<1x256xf32>
      %484 = vector.broadcast %481 : f32 to vector<1x256xf32>
      %485 = arith.mulf %484, %483 : vector<1x256xf32>
      %486 = arith.addf %480, %485 : vector<1x256xf32>
      %487 = vector.extract_strided_slice %29 {offsets = [0, 85], sizes = [1, 256], strides = [1, 1]} : vector<1x358xf32> to vector<1x256xf32>
      %488 = vector.broadcast %482 : f32 to vector<1x256xf32>
      %489 = arith.mulf %488, %487 : vector<1x256xf32>
      %490 = arith.addf %486, %489 : vector<1x256xf32>
      %c47 = arith.constant 47 : index
      %491 = memref.load %arg2[%c47] : memref<98xf32, #tpu.memory_space<smem>>
      %c96 = arith.constant 96 : index
      %492 = memref.load %arg2[%c96] : memref<98xf32, #tpu.memory_space<smem>>
      %493 = vector.extract_strided_slice %28 {offsets = [0, 101], sizes = [1, 256], strides = [1, 1]} : vector<1x358xf32> to vector<1x256xf32>
      %494 = vector.broadcast %491 : f32 to vector<1x256xf32>
      %495 = arith.mulf %494, %493 : vector<1x256xf32>
      %496 = arith.addf %490, %495 : vector<1x256xf32>
      %497 = vector.extract_strided_slice %29 {offsets = [0, 101], sizes = [1, 256], strides = [1, 1]} : vector<1x358xf32> to vector<1x256xf32>
      %498 = vector.broadcast %492 : f32 to vector<1x256xf32>
      %499 = arith.mulf %498, %497 : vector<1x256xf32>
      %500 = arith.addf %496, %499 : vector<1x256xf32>
      %c-2_i32 = arith.constant -2 : i32
      %501 = vector.broadcast %c-2_i32 : i32 to vector<1x256xi32>
      %502 = arith.cmpi sge, %46, %501 : vector<1x256xi32>
      %c14_i32 = arith.constant 14 : i32
      %503 = vector.broadcast %c14_i32 : i32 to vector<1x256xi32>
      %504 = arith.cmpi slt, %46, %503 : vector<1x256xi32>
      %505 = arith.andi %502, %504 : vector<1x256xi1>
      %cst_34 = arith.constant 0.000000e+00 : f32
      %506 = vector.broadcast %cst_34 : f32 to vector<1x256xf32>
      %507 = arith.select %505, %500, %506 : vector<1x256xi1>, vector<1x256xf32>
      %cst_35 = arith.constant 0.000000e+00 : f32
      %508 = vector.broadcast %cst_35 : f32 to vector<1x256xf32>
      %c6 = arith.constant 6 : index
      %509 = memref.load %arg2[%c6] : memref<98xf32, #tpu.memory_space<smem>>
      %c55 = arith.constant 55 : index
      %510 = memref.load %arg2[%c55] : memref<98xf32, #tpu.memory_space<smem>>
      %511 = vector.extract_strided_slice %28 {offsets = [0, 6], sizes = [1, 256], strides = [1, 1]} : vector<1x358xf32> to vector<1x256xf32>
      %512 = vector.broadcast %509 : f32 to vector<1x256xf32>
      %513 = arith.mulf %512, %511 : vector<1x256xf32>
      %514 = arith.addf %508, %513 : vector<1x256xf32>
      %515 = vector.extract_strided_slice %29 {offsets = [0, 6], sizes = [1, 256], strides = [1, 1]} : vector<1x358xf32> to vector<1x256xf32>
      %516 = vector.broadcast %510 : f32 to vector<1x256xf32>
      %517 = arith.mulf %516, %515 : vector<1x256xf32>
      %518 = arith.addf %514, %517 : vector<1x256xf32>
      %c13 = arith.constant 13 : index
      %519 = memref.load %arg2[%c13] : memref<98xf32, #tpu.memory_space<smem>>
      %c62 = arith.constant 62 : index
      %520 = memref.load %arg2[%c62] : memref<98xf32, #tpu.memory_space<smem>>
      %521 = vector.extract_strided_slice %28 {offsets = [0, 22], sizes = [1, 256], strides = [1, 1]} : vector<1x358xf32> to vector<1x256xf32>
      %522 = vector.broadcast %519 : f32 to vector<1x256xf32>
      %523 = arith.mulf %522, %521 : vector<1x256xf32>
      %524 = arith.addf %518, %523 : vector<1x256xf32>
      %525 = vector.extract_strided_slice %29 {offsets = [0, 22], sizes = [1, 256], strides = [1, 1]} : vector<1x358xf32> to vector<1x256xf32>
      %526 = vector.broadcast %520 : f32 to vector<1x256xf32>
      %527 = arith.mulf %526, %525 : vector<1x256xf32>
      %528 = arith.addf %524, %527 : vector<1x256xf32>
      %c20 = arith.constant 20 : index
      %529 = memref.load %arg2[%c20] : memref<98xf32, #tpu.memory_space<smem>>
      %c69 = arith.constant 69 : index
      %530 = memref.load %arg2[%c69] : memref<98xf32, #tpu.memory_space<smem>>
      %531 = vector.extract_strided_slice %28 {offsets = [0, 38], sizes = [1, 256], strides = [1, 1]} : vector<1x358xf32> to vector<1x256xf32>
      %532 = vector.broadcast %529 : f32 to vector<1x256xf32>
      %533 = arith.mulf %532, %531 : vector<1x256xf32>
      %534 = arith.addf %528, %533 : vector<1x256xf32>
      %535 = vector.extract_strided_slice %29 {offsets = [0, 38], sizes = [1, 256], strides = [1, 1]} : vector<1x358xf32> to vector<1x256xf32>
      %536 = vector.broadcast %530 : f32 to vector<1x256xf32>
      %537 = arith.mulf %536, %535 : vector<1x256xf32>
      %538 = arith.addf %534, %537 : vector<1x256xf32>
      %c27 = arith.constant 27 : index
      %539 = memref.load %arg2[%c27] : memref<98xf32, #tpu.memory_space<smem>>
      %c76 = arith.constant 76 : index
      %540 = memref.load %arg2[%c76] : memref<98xf32, #tpu.memory_space<smem>>
      %541 = vector.extract_strided_slice %28 {offsets = [0, 54], sizes = [1, 256], strides = [1, 1]} : vector<1x358xf32> to vector<1x256xf32>
      %542 = vector.broadcast %539 : f32 to vector<1x256xf32>
      %543 = arith.mulf %542, %541 : vector<1x256xf32>
      %544 = arith.addf %538, %543 : vector<1x256xf32>
      %545 = vector.extract_strided_slice %29 {offsets = [0, 54], sizes = [1, 256], strides = [1, 1]} : vector<1x358xf32> to vector<1x256xf32>
      %546 = vector.broadcast %540 : f32 to vector<1x256xf32>
      %547 = arith.mulf %546, %545 : vector<1x256xf32>
      %548 = arith.addf %544, %547 : vector<1x256xf32>
      %c34 = arith.constant 34 : index
      %549 = memref.load %arg2[%c34] : memref<98xf32, #tpu.memory_space<smem>>
      %c83 = arith.constant 83 : index
      %550 = memref.load %arg2[%c83] : memref<98xf32, #tpu.memory_space<smem>>
      %551 = vector.extract_strided_slice %28 {offsets = [0, 70], sizes = [1, 256], strides = [1, 1]} : vector<1x358xf32> to vector<1x256xf32>
      %552 = vector.broadcast %549 : f32 to vector<1x256xf32>
      %553 = arith.mulf %552, %551 : vector<1x256xf32>
      %554 = arith.addf %548, %553 : vector<1x256xf32>
      %555 = vector.extract_strided_slice %29 {offsets = [0, 70], sizes = [1, 256], strides = [1, 1]} : vector<1x358xf32> to vector<1x256xf32>
      %556 = vector.broadcast %550 : f32 to vector<1x256xf32>
      %557 = arith.mulf %556, %555 : vector<1x256xf32>
      %558 = arith.addf %554, %557 : vector<1x256xf32>
      %c41 = arith.constant 41 : index
      %559 = memref.load %arg2[%c41] : memref<98xf32, #tpu.memory_space<smem>>
      %c90 = arith.constant 90 : index
      %560 = memref.load %arg2[%c90] : memref<98xf32, #tpu.memory_space<smem>>
      %561 = vector.extract_strided_slice %28 {offsets = [0, 86], sizes = [1, 256], strides = [1, 1]} : vector<1x358xf32> to vector<1x256xf32>
      %562 = vector.broadcast %559 : f32 to vector<1x256xf32>
      %563 = arith.mulf %562, %561 : vector<1x256xf32>
      %564 = arith.addf %558, %563 : vector<1x256xf32>
      %565 = vector.extract_strided_slice %29 {offsets = [0, 86], sizes = [1, 256], strides = [1, 1]} : vector<1x358xf32> to vector<1x256xf32>
      %566 = vector.broadcast %560 : f32 to vector<1x256xf32>
      %567 = arith.mulf %566, %565 : vector<1x256xf32>
      %568 = arith.addf %564, %567 : vector<1x256xf32>
      %c48 = arith.constant 48 : index
      %569 = memref.load %arg2[%c48] : memref<98xf32, #tpu.memory_space<smem>>
      %c97 = arith.constant 97 : index
      %570 = memref.load %arg2[%c97] : memref<98xf32, #tpu.memory_space<smem>>
      %571 = vector.extract_strided_slice %28 {offsets = [0, 102], sizes = [1, 256], strides = [1, 1]} : vector<1x358xf32> to vector<1x256xf32>
      %572 = vector.broadcast %569 : f32 to vector<1x256xf32>
      %573 = arith.mulf %572, %571 : vector<1x256xf32>
      %574 = arith.addf %568, %573 : vector<1x256xf32>
      %575 = vector.extract_strided_slice %29 {offsets = [0, 102], sizes = [1, 256], strides = [1, 1]} : vector<1x358xf32> to vector<1x256xf32>
      %576 = vector.broadcast %570 : f32 to vector<1x256xf32>
      %577 = arith.mulf %576, %575 : vector<1x256xf32>
      %578 = arith.addf %574, %577 : vector<1x256xf32>
      %c-3_i32 = arith.constant -3 : i32
      %579 = vector.broadcast %c-3_i32 : i32 to vector<1x256xi32>
      %580 = arith.cmpi sge, %46, %579 : vector<1x256xi32>
      %c13_i32 = arith.constant 13 : i32
      %581 = vector.broadcast %c13_i32 : i32 to vector<1x256xi32>
      %582 = arith.cmpi slt, %46, %581 : vector<1x256xi32>
      %583 = arith.andi %580, %582 : vector<1x256xi1>
      %cst_36 = arith.constant 0.000000e+00 : f32
      %584 = vector.broadcast %cst_36 : f32 to vector<1x256xf32>
      %585 = arith.select %583, %578, %584 : vector<1x256xi1>, vector<1x256xf32>
      %586 = arith.addf %124, %202 : vector<1x256xf32>
      %587 = arith.addf %280, %351 : vector<1x256xf32>
      %588 = arith.addf %429, %507 : vector<1x256xf32>
      %589 = arith.addf %586, %587 : vector<1x256xf32>
      %590 = arith.addf %588, %585 : vector<1x256xf32>
      %591 = arith.addf %589, %590 : vector<1x256xf32>
      %592 = arith.negf %591 : vector<1x256xf32>
      %593 = math.exp %592 : vector<1x256xf32>
      %cst_37 = arith.constant 1.000000e+00 : f32
      %594 = vector.broadcast %cst_37 : f32 to vector<1x256xf32>
      %595 = arith.addf %594, %593 : vector<1x256xf32>
      %596 = arith.divf %594, %595 : vector<1x256xf32>
      %c0_38 = arith.constant 0 : index
      %c0_39 = arith.constant 0 : index
      %c0_40 = arith.constant 0 : index
      %597 = vector.load %arg4[%c0_38, %c0_39, %c0_40] : memref<1x1x256xf32, #tpu.memory_space<vmem>>, vector<1x1x256xf32>
      %598 = vector.shape_cast %597 : vector<1x1x256xf32> to vector<1x256xf32>
      %599 = vector.shape_cast %596 : vector<1x256xf32> to vector<1x1x256xf32>
      tpu.vector_store %arg4[%c0_38, %c0_39, %c0_40], %599 {strides = array<i32>} : memref<1x1x256xf32, #tpu.memory_space<vmem>>, vector<1x1x256xf32>,
    } else {
    }
    return
  }
  func.func @transform_0(%arg0: i32, %arg1: i32, %arg2: memref<98xf32, #tpu.memory_space<smem>>) -> (i32, i32, i32) {
    %c0_i32 = arith.constant 0 : i32
    %c0_i32_0 = arith.constant 0 : i32
    return %arg0, %arg1, %c0_i32 : i32, i32, i32
  }
  func.func @transform_1(%arg0: i32, %arg1: i32, %arg2: memref<98xf32, #tpu.memory_space<smem>>) -> (i32, i32, i32) {
    %c0_i32 = arith.constant 0 : i32
    %c0_i32_0 = arith.constant 0 : i32
    %c0_i32_1 = arith.constant 0 : i32
    return %arg0, %c0_i32, %c0_i32_0 : i32, i32, i32
  }
}

</mosaic_0001>

<llo_original>
// kernel: tpu_custom_call.1
$region0: #{tpu_custom_call.1}
  #allocation0 [shape = 'u32[]', space=smem, size = 0x4, offset = 0x4, fixed_abs, tag = 'smem constant byte address 0x4 - core index']
  #allocation1 [shape = 'u32[144,128]{1,0:T(1,128)}', space=vmem, size = 0x12000, scoped, tag = 'internal scratch']
  #allocation2 [shape = 'f32[8,256]{1,0:T(8,128)}', space=vmem, size = 0x2000, scoped, tag = 'scratch operand']
  #allocation3 [shape = 'f32[8,256]{1,0:T(8,128)}', space=vmem, size = 0x2000, scoped, tag = 'scratch operand']
  #allocation4 [shape = 's32[1]{0}', space=sflag, size = 0x4, scoped, tag = 'scoped memory for tpu_custom_call.1']
  #allocation5 [shape = 'u8[512]{0}', space=smem, size = 0x200, scoped, tag = 'prefetched SMEM operand 0']
  %s0 = inlined_call_operand.hbm [shape: f32[98], index: 0, kind: input, shape index: {}]
  %s1 = inlined_call_operand.hbm [shape: f32[2,4,256], index: 1, kind: input, shape index: {}]
  %s2 = inlined_call_operand.hbm [shape: f32[2,1,256], index: 2, kind: output, shape index: {}]
  %s3 = sld [smem:[#allocation0]]
  $region53: #{tpu_custom_call.1} parent=0
    _
  %s5 = ssub.s32 1, %s3
  %s6 = scalar_select 0, %s5, %s3
  %8 = dma.hbm_to_smem %s0, 16, [#allocation5], [#allocation4]
  %9 = dma.done [#allocation4], 16
  %10 = sfence
  $region1: #{tpu_custom_call.1} parent=0
    #allocation6 [shape = 'u8[8192]{0}', space=vmem, size = 0x2000, scoped, tag = 'input window, operand 1']
    #allocation7 [shape = 's32[2]{0}', space=sflag, size = 0x8, scoped, tag = 'scoped memory for tpu_custom_call.1']
    #allocation8 [shape = 's32[2]{0}', space=sflag, size = 0x8, scoped, tag = 'scoped memory for tpu_custom_call.1']
    #allocation9 [shape = 'u8[2048]{0}', space=vmem, size = 0x800, scoped, tag = 'output window, operand 0']
    %11 = vsyncpa [#allocation7], 0
    %s12 = scalar_lea.sflag [#allocation7], 1
    %13 = vsyncpa %s12, 0
    %14 = vsyncpa [#allocation8], 0
    %s15 = scalar_lea.sflag [#allocation8], 1
    %16 = vsyncpa %s15, 0
    loop: start=0, step=1, limit=4
    $region2: #{tpu_custom_call.1} parent=1 // loop_pre_header
      _
    $region3: #{tpu_custom_call.1} parent=1 // loop_header
      %s18 = sphi 0, %s22
      %p19 = scmp.ge.s32.totalorder %s18, 4
      %s25 = sphi 0, %s37
      %s26 = sphi 0, %s33
      %s27 = sphi 0, %s25
      %s28 = sphi 0, %s26
      %s29 = sphi 0, %s27
      %s30 = sphi 0, %s28
      %s42 = sphi 0, %s44
      %s45 = sphi 0, %s42
      %s46 = sphi 0, %s45
      %s62 = sphi 0, %s46
      %s68 = sphi 0, %s70
      %s71 = sphi 0, %s68
      %s72 = sphi 0, %s71
      %s88 = sphi 0, %s72
    $region4: #{tpu_custom_call.1} parent=1 // loop_header_branch
      %21 = sbr.rel (%p19) target = $region8
    $region5: #{tpu_custom_call.1} parent=1 // loop_body
      %s23 = ssub.s32 %s18, 1
      %s24 = ssub.s32 %s18, 2
      %s31 = sadd.s32 1, %s26
      %p32 = scmp.ge.s32.totalorder %s31, 1
      %s33 = scalar_select %p32, 0, %s31
      %s34 = sadd.s32 1, %s25
      %s35 = scalar_select %p32, %s34, %s25
      %p36 = scmp.ge.s32.totalorder %s35, 2
      %s37 = scalar_select %p36, 0, %s35
      %s38 = ssub.s32 %s25, %s37
      %s39 = ssub.s32 %s26, %s33
      %s40 = sor.u32 %s38, %s39
      %p41 = scmp.eq.s32.totalorder %s40, 0
      %s43 = sadd.s32 %s42, 1
      %s44 = scalar_select %p41, %s42, %s43
      %p47 = pneg %p41
      %p48 = scmp.eq.s32.totalorder %s18, 1
      %p49 = por %p47, %p48
      %p50 = scmp.ne.s32.totalorder %s42, %s45
      %p51 = scmp.eq.s32.totalorder %s18, 0
      %p52 = por %p50, %p51
      %p53 = scmp.ne.s32.totalorder %s42, %s45
      %p54 = scmp.eq.s32.totalorder %s23, 1
      %p55 = por %p53, %p54
      %p56 = scmp.ne.s32.totalorder %s45, %s46
      %p57 = scmp.eq.s32.totalorder %s23, 0
      %p58 = por %p56, %p57
      %p59 = scmp.ne.s32.totalorder %s45, %s46
      %p60 = scmp.eq.s32.totalorder %s24, 1
      %p61 = por %p59, %p60
      %p63 = scmp.ne.s32.totalorder %s46, %s62
      %p64 = scmp.eq.s32.totalorder %s24, 0
      %p65 = por %p63, %p64
      %s66 = ssub.s32 %s25, %s37
      %p67 = scmp.eq.s32.totalorder %s66, 0
      %s69 = sadd.s32 %s68, 1
      %s70 = scalar_select %p67, %s68, %s69
      %p73 = pneg %p67
      %p74 = scmp.eq.s32.totalorder %s18, 1
      %p75 = por %p73, %p74
      %p76 = scmp.ne.s32.totalorder %s68, %s71
      %p77 = scmp.eq.s32.totalorder %s18, 0
      %p78 = por %p76, %p77
      %p79 = scmp.ne.s32.totalorder %s68, %s71
      %p80 = scmp.eq.s32.totalorder %s23, 1
      %p81 = por %p79, %p80
      %p82 = scmp.ne.s32.totalorder %s71, %s72
      %p83 = scmp.eq.s32.totalorder %s23, 0
      %p84 = por %p82, %p83
      %p85 = scmp.ne.s32.totalorder %s71, %s72
      %p86 = scmp.eq.s32.totalorder %s24, 1
      %p87 = por %p85, %p86
      %p89 = scmp.ne.s32.totalorder %s72, %s88
      %p90 = scmp.eq.s32.totalorder %s24, 0
      %p91 = por %p89, %p90
      %p92 = scmp.le.s32.totalorder 1, %s18
      %p93 = scmp.lt.s32.totalorder %s18, 3
      %p94 = pnand %p92, %p93
      %p95 = pneg %p94
      // Predicated region
      $region9: #{tpu_custom_call.1} parent=5 // pred_check
        _
      $region10: #{tpu_custom_call.1} parent=5 // pred_check_branch
        %97 = sbr.rel (%p94) target = $region12
      $region11: #{tpu_custom_call.1} parent=5 // pred_region
        %s98 = ssub.s32 %s18, 1
      $region12: #{tpu_custom_call.1} parent=5 // pred_fallthru
        _
      %p99 = scmp.lt.s32.totalorder %s18, 2
      // Predicated region
      $region13: #{tpu_custom_call.1} parent=5 // pred_check
        %p100 = pneg %p99
      $region14: #{tpu_custom_call.1} parent=5 // pred_check_branch
        %102 = sbr.rel (%p100) target = $region16
      $region15: #{tpu_custom_call.1} parent=5 // pred_region
        // Predicated region
        $region17: #{tpu_custom_call.1} parent=15 // pred_check
          %p103 = pneg %p52
        $region18: #{tpu_custom_call.1} parent=15 // pred_check_branch
          %105 = sbr.rel (%p103) target = $region20
        $region19: #{tpu_custom_call.1} parent=15 // pred_region
          %s106 = sand.u32 %s42, 1
          %s107 = scalar_lea.sflag [#allocation7], %s106
          %s108 = sand.u32 %s42, 1
          %s109 = smul.addr %s108, 8
          %s110 = scalar_lea.vmem [#allocation6], %s109
          %s112 = ssub.s32 128, 128
          %113 = vsyncadd %s107, %s112
          %s114 = smul.addr %s26, 2
          %s115 = smul.addr %s25, 2
          %s116 = sadd.s32 %s114, %s115
          %s117 = smul.addr %s116, 64
          %s118 = scalar_lea.hbm %s1, %s117
          %s120 = sshll.u32 %s110, 4
          %s121 = int_to_ptr.vmem [resolvable:$true] %s120
          %123 = dma.hbm_to_vmem [thread:$0]  %s118, 128, %s121, %s107
        $region20: #{tpu_custom_call.1} parent=15 // pred_fallthru
          _
      $region16: #{tpu_custom_call.1} parent=5 // pred_fallthru
        _
      %p124 = scmp.le.s32.totalorder 1, %s18
      %p125 = scmp.lt.s32.totalorder %s18, 3
      %p126 = pnand %p124, %p125
      %p127 = pneg %p126
      // Predicated region
      $region21: #{tpu_custom_call.1} parent=5 // pred_check
        _
      $region22: #{tpu_custom_call.1} parent=5 // pred_check_branch
        %129 = sbr.rel (%p126) target = $region24
      $region23: #{tpu_custom_call.1} parent=5 // pred_region
        %s130 = ssub.s32 %s18, 1
        %s131 = sand.u32 %s45, 1
        %s132 = scalar_lea.sflag [#allocation7], %s131
        %s133 = sand.u32 %s45, 1
        %s134 = smul.addr %s133, 8
        %s135 = scalar_lea.vmem [#allocation6], %s134
        // Predicated region
        $region25: #{tpu_custom_call.1} parent=23 // pred_check
          %p136 = pneg %p58
        $region26: #{tpu_custom_call.1} parent=23 // pred_check_branch
          %138 = sbr.rel (%p136) target = $region28
        $region27: #{tpu_custom_call.1} parent=23 // pred_region
          %139 = dma.done %s132, 128
        $region28: #{tpu_custom_call.1} parent=23 // pred_fallthru
          _
        %s140 = sand.u32 %s45, 1
        %s141 = scalar_lea.sflag [#allocation7], %s140
        %s142 = sand.u32 %s45, 1
        %s143 = smul.addr %s142, 8
        %s144 = scalar_lea.vmem [#allocation6], %s143
        %p145 = pneg %p58
        %p146 = pneg %p55
        %p147 = pneg %p84
        %p148 = pneg %p81
        %s149 = sand.u32 %s71, 1
        %s150 = scalar_lea.sflag [#allocation8], %s149
        %s151 = sand.u32 %s71, 1
        %s152 = smul.addr %s151, 2
        %s153 = scalar_lea.vmem [#allocation9], %s152
        %v154 = vld [vmem:[%s135] sm:$0xff]
        %v156 = vcombine.high %v154, %v154
        %vm158 = vcmask 1043456
        %v159 = vsel %vm158, %v154, 0.0
        %v160 = vrot.slane %v159, 4
        %v161 = vadd.f32 %v159, %v160
        %v162 = vrot.slane %v161, 2
        %v163 = vadd.f32 %v161, %v162
        %v164 = vrot.slane %v163, 1
        %v165 = vadd.f32 %v163, %v164
        %v166 = vsel %vm158, %v156, 0.0
        %v167 = vrot.slane %v166, 4
        %v168 = vadd.f32 %v166, %v167
        %v169 = vrot.slane %v168, 2
        %v170 = vadd.f32 %v168, %v169
        %v171 = vrot.slane %v170, 1
        %v172 = vadd.f32 %v170, %v171
        %v173 = vsel %vm158, %v154, -inf
        %v174 = vrot.slane %v173, 4
        %v175 = vmax.f32 %v173, %v174
        %v176 = vrot.slane %v175, 2
        %v177 = vmax.f32 %v175, %v176
        %v178 = vrot.slane %v177, 1
        %v179 = vmax.f32 %v177, %v178
        %v180 = vsel %vm158, %v156, -inf
        %v181 = vrot.slane %v180, 4
        %v182 = vmax.f32 %v180, %v181
        %v183 = vrot.slane %v182, 2
        %v184 = vmax.f32 %v182, %v183
        %v185 = vrot.slane %v184, 1
        %v186 = vmax.f32 %v184, %v185
        %vm187 = vcmask 1040384
        %v188 = vsel %vm187, %v165, 0.0
        %v189 = vsel %vm187, %v172, 0.0
        %v190 = vsel %vm187, %v179, -inf
        %v191 = vsel %vm187, %v186, -inf
        %p192 = scmp.eq.s32.totalorder %s28, 0
        // Predicated region
        $region29: #{tpu_custom_call.1} parent=23 // pred_check
          %p193 = pneg %p192
        $region30: #{tpu_custom_call.1} parent=23 // pred_check_branch
          %195 = sbr.rel (%p193) target = $region32
        $region31: #{tpu_custom_call.1} parent=23 // pred_region
          %196 = vst [vmem:[#allocation2] sm:$0xff] %v188
          %197 = vst [vmem:[#allocation2 + $0x8] sm:$0xff] %v189
          %198 = vst [vmem:[#allocation3] sm:$0xff] %v190
          %199 = vst [vmem:[#allocation3 + $0x8] sm:$0xff] %v191
        $region32: #{tpu_custom_call.1} parent=23 // pred_fallthru
          _
        %p200 = scmp.gt.s32.totalorder %s28, 0
        // Predicated region
        $region33: #{tpu_custom_call.1} parent=23 // pred_check
          %p201 = pneg %p200
        $region34: #{tpu_custom_call.1} parent=23 // pred_check_branch
          %203 = sbr.rel (%p201) target = $region36
        $region35: #{tpu_custom_call.1} parent=23 // pred_region
          %v204 = vld [vmem:[#allocation2] sm:$0xff]
          %v205 = vld [vmem:[#allocation2 + $0x8] sm:$0xff]
          %v206 = vadd.f32 %v204, %v188
          %v207 = vadd.f32 %v205, %v189
          %208 = vst [vmem:[#allocation2] sm:$0xff] %v206
          %209 = vst [vmem:[#allocation2 + $0x8] sm:$0xff] %v207
          %v210 = vld [vmem:[#allocation3] sm:$0xff]
          %v211 = vld [vmem:[#allocation3 + $0x8] sm:$0xff]
          %v212 = vmax.f32 %v210, %v190
          %v213 = vmax.f32 %v211, %v191
          %214 = vst [vmem:[#allocation3] sm:$0xff] %v212
          %215 = vst [vmem:[#allocation3 + $0x8] sm:$0xff] %v213
        $region36: #{tpu_custom_call.1} parent=23 // pred_fallthru
          _
        // Predicated region
        $region37: #{tpu_custom_call.1} parent=23 // pred_check
          %p216 = pneg %p192
        $region38: #{tpu_custom_call.1} parent=23 // pred_check_branch
          %218 = sbr.rel (%p216) target = $region40
        $region39: #{tpu_custom_call.1} parent=23 // pred_region
          %v219 = vld [vmem:[#allocation2] sm:$0xff]
          %v220 = vld [vmem:[#allocation2 + $0x8] sm:$0xff]
          %v221 = vrot.slane %v219, 4
          %v222 = vadd.f32 %v219, %v221
          %v223 = vrot.slane %v222, 2
          %v224 = vadd.f32 %v222, %v223
          %v225 = vrot.slane %v224, 1
          %v226 = vadd.f32 %v224, %v225
          %v227 = vrot.slane %v220, 4
          %v228 = vadd.f32 %v220, %v227
          %v229 = vrot.slane %v228, 2
          %v230 = vadd.f32 %v228, %v229
          %v231 = vrot.slane %v230, 1
          %v232 = vadd.f32 %v230, %v231
          %v233 = vmul.f32 %v226, 0.25
          %v234 = vmul.f32 %v232, 0.25
          %v235 = vld [vmem:[#allocation3] sm:$0xff]
          %v236 = vld [vmem:[#allocation3 + $0x8] sm:$0xff]
          %v237 = vrot.slane %v235, 4
          %v238 = vmax.f32 %v235, %v237
          %v239 = vrot.slane %v238, 2
          %v240 = vmax.f32 %v238, %v239
          %v241 = vrot.slane %v240, 1
          %v242 = vmax.f32 %v240, %v241
          %v243 = vrot.slane %v236, 4
          %v244 = vmax.f32 %v236, %v243
          %v245 = vrot.slane %v244, 2
          %v246 = vmax.f32 %v244, %v245
          %v247 = vrot.slane %v246, 1
          %v248 = vmax.f32 %v246, %v247
          %251 = vrot.lane.b32.xlu0 %v233, 51
          %v252 = vpop.permute.xlu0 %251
          %253 = vrot.lane.b32.xlu0 %v234, 51
          %v254 = vpop.permute.xlu0 %253
          %vm255 = vcmask 416768
          %v256 = vsel %vm255, %v252, %v254
          %v260 = vsel %vm255, 0.0, %v252
          %v261 = vsel %vm255, %v254, 0.0
          %264 = vrot.lane.b32.xlu0 %v242, 51
          %v265 = vpop.permute.xlu0 %264
          %266 = vrot.lane.b32.xlu0 %v248, 51
          %v267 = vpop.permute.xlu0 %266
          %v268 = vsel %vm255, %v265, %v267
          %v272 = vsel %vm255, 0.0, %v265
          %v273 = vsel %vm255, %v267, 0.0
          %v274 = vlaneseq
          %v275 = vand.u32 %v274, 127
          %v276 = vadd.s32 %v275, 128
          %vm277 = vcmp.lt.s32.totalorder %v275, 0
          %v278 = vsub.s32 0, %v275
          %v279 = vsel %vm277, %v278, %v275
          %v280 = vshrl.u32 %v279, 4
          %v281 = vand.u32 %v279, 15
          %v282 = vsub.s32 0, %v281
          %v283 = vsel %vm277, %v282, %v281
          %vm284 = vcmp.lt.s32.totalorder %v276, 0
          %v285 = vsub.s32 0, %v276
          %v286 = vsel %vm284, %v285, %v276
          %v287 = vshrl.u32 %v286, 4
          %v288 = vand.u32 %v286, 15
          %v289 = vsub.s32 0, %v288
          %v290 = vsel %vm284, %v289, %v288
          %vm291 = vcmp.ne.s32.totalorder %v283, 0
          %vm292 = vcmp.ne.s32.totalorder %v290, 0
          %vm293 = vcmp.lt.s32.totalorder %v283, 0
          %vm294 = vcmp.lt.s32.totalorder %v290, 0
          %vm295 = vmand %vm293, %vm291
          %vm296 = vmand %vm294, %vm292
          %v297 = vadd.s32 %v283, 16
          %v298 = vadd.s32 %v290, 16
          %v299 = vsel %vm295, %v297, %v283
          %v300 = vsel %vm296, %v298, %v290
          %s301 = sld [smem:[#allocation5]]
          %s302 = sld [smem:[#allocation5 + $0x31]]
          %v303 = vstv %s301
          %v304 = vmul.f32 %v303, %v260
          %v305 = vmul.f32 %v303, %v256
          %v306 = vadd.f32 %v304, 0.0
          %v307 = vadd.f32 %v305, 0.0
          %v308 = vstv %s302
          %v309 = vmul.f32 %v308, %v272
          %v310 = vmul.f32 %v308, %v268
          %v311 = vadd.f32 %v306, %v309
          %v312 = vadd.f32 %v307, %v310
          %s313 = sld [smem:[#allocation5 + $0x7]]
          %s314 = sld [smem:[#allocation5 + $0x38]]
          %v315 = vstv %s313
          %v316 = vmul.f32 %v315, %v260
          %v317 = vmul.f32 %v315, %v256
          %v318 = vmul.f32 %v315, %v261
          %322 = vrot.lane.b32.xlu0 %v316, 112
          %v323 = vpop.permute.xlu0 %322
          %324 = vrot.lane.b32.xlu0 %v317, 112
          %v325 = vpop.permute.xlu0 %324
          %326 = vrot.lane.b32.xlu0 %v318, 112
          %v327 = vpop.permute.xlu0 %326
          %vm328 = vcmask 916480
          %v329 = vsel %vm328, %v323, %v325
          %v330 = vsel %vm328, %v325, %v327
          %v333 = vadd.f32 %v311, %v329
          %v334 = vadd.f32 %v312, %v330
          %v335 = vstv %s314
          %v336 = vmul.f32 %v335, %v272
          %v337 = vmul.f32 %v335, %v268
          %v338 = vmul.f32 %v335, %v273
          %342 = vrot.lane.b32.xlu0 %v336, 112
          %v343 = vpop.permute.xlu0 %342
          %344 = vrot.lane.b32.xlu0 %v337, 112
          %v345 = vpop.permute.xlu0 %344
          %346 = vrot.lane.b32.xlu0 %v338, 112
          %v347 = vpop.permute.xlu0 %346
          %v348 = vsel %vm328, %v343, %v345
          %v349 = vsel %vm328, %v345, %v347
          %v352 = vadd.f32 %v333, %v348
          %v353 = vadd.f32 %v334, %v349
          %s354 = sld [smem:[#allocation5 + $0xe]]
          %s355 = sld [smem:[#allocation5 + $0x3f]]
          %v356 = vstv %s354
          %v357 = vmul.f32 %v356, %v260
          %v358 = vmul.f32 %v356, %v256
          %v359 = vmul.f32 %v356, %v261
          %363 = vrot.lane.b32.xlu0 %v357, 96
          %v364 = vpop.permute.xlu0 %363
          %365 = vrot.lane.b32.xlu0 %v358, 96
          %v366 = vpop.permute.xlu0 %365
          %367 = vrot.lane.b32.xlu0 %v359, 96
          %v368 = vpop.permute.xlu0 %367
          %vm369 = vcmask 785408
          %v370 = vsel %vm369, %v364, %v366
          %v371 = vsel %vm369, %v366, %v368
          %v374 = vadd.f32 %v352, %v370
          %v375 = vadd.f32 %v353, %v371
          %v376 = vstv %s355
          %v377 = vmul.f32 %v376, %v272
          %v378 = vmul.f32 %v376, %v268
          %v379 = vmul.f32 %v376, %v273
          %383 = vrot.lane.b32.xlu0 %v377, 96
          %v384 = vpop.permute.xlu0 %383
          %385 = vrot.lane.b32.xlu0 %v378, 96
          %v386 = vpop.permute.xlu0 %385
          %387 = vrot.lane.b32.xlu0 %v379, 96
          %v388 = vpop.permute.xlu0 %387
          %v389 = vsel %vm369, %v384, %v386
          %v390 = vsel %vm369, %v386, %v388
          %v393 = vadd.f32 %v374, %v389
          %v394 = vadd.f32 %v375, %v390
          %s395 = sld [smem:[#allocation5 + $0x15]]
          %s396 = sld [smem:[#allocation5 + $0x46]]
          %v397 = vstv %s395
          %v398 = vmul.f32 %v397, %v260
          %v399 = vmul.f32 %v397, %v256
          %v400 = vmul.f32 %v397, %v261
          %404 = vrot.lane.b32.xlu0 %v398, 80
          %v405 = vpop.permute.xlu0 %404
          %406 = vrot.lane.b32.xlu0 %v399, 80
          %v407 = vpop.permute.xlu0 %406
          %408 = vrot.lane.b32.xlu0 %v400, 80
          %v409 = vpop.permute.xlu0 %408
          %vm410 = vcmask 654336
          %v411 = vsel %vm410, %v405, %v407
          %v412 = vsel %vm410, %v407, %v409
          %v415 = vadd.f32 %v393, %v411
          %v416 = vadd.f32 %v394, %v412
          %v417 = vstv %s396
          %v418 = vmul.f32 %v417, %v272
          %v419 = vmul.f32 %v417, %v268
          %v420 = vmul.f32 %v417, %v273
          %424 = vrot.lane.b32.xlu0 %v418, 80
          %v425 = vpop.permute.xlu0 %424
          %426 = vrot.lane.b32.xlu0 %v419, 80
          %v427 = vpop.permute.xlu0 %426
          %428 = vrot.lane.b32.xlu0 %v420, 80
          %v429 = vpop.permute.xlu0 %428
          %v430 = vsel %vm410, %v425, %v427
          %v431 = vsel %vm410, %v427, %v429
          %v434 = vadd.f32 %v415, %v430
          %v435 = vadd.f32 %v416, %v431
          %s436 = sld [smem:[#allocation5 + $0x1c]]
          %s437 = sld [smem:[#allocation5 + $0x4d]]
          %v438 = vstv %s436
          %v439 = vmul.f32 %v438, %v260
          %v440 = vmul.f32 %v438, %v256
          %v441 = vmul.f32 %v438, %v261
          %445 = vrot.lane.b32.xlu0 %v439, 64
          %v446 = vpop.permute.xlu0 %445
          %447 = vrot.lane.b32.xlu0 %v440, 64
          %v448 = vpop.permute.xlu0 %447
          %449 = vrot.lane.b32.xlu0 %v441, 64
          %v450 = vpop.permute.xlu0 %449
          %vm451 = vcmask 523264
          %v452 = vsel %vm451, %v446, %v448
          %v453 = vsel %vm451, %v448, %v450
          %v456 = vadd.f32 %v434, %v452
          %v457 = vadd.f32 %v435, %v453
          %v458 = vstv %s437
          %v459 = vmul.f32 %v458, %v272
          %v460 = vmul.f32 %v458, %v268
          %v461 = vmul.f32 %v458, %v273
          %465 = vrot.lane.b32.xlu0 %v459, 64
          %v466 = vpop.permute.xlu0 %465
          %467 = vrot.lane.b32.xlu0 %v460, 64
          %v468 = vpop.permute.xlu0 %467
          %469 = vrot.lane.b32.xlu0 %v461, 64
          %v470 = vpop.permute.xlu0 %469
          %v471 = vsel %vm451, %v466, %v468
          %v472 = vsel %vm451, %v468, %v470
          %v475 = vadd.f32 %v456, %v471
          %v476 = vadd.f32 %v457, %v472
          %s477 = sld [smem:[#allocation5 + $0x23]]
          %s478 = sld [smem:[#allocation5 + $0x54]]
          %v479 = vstv %s477
          %v480 = vmul.f32 %v479, %v260
          %v481 = vmul.f32 %v479, %v256
          %v482 = vmul.f32 %v479, %v261
          %486 = vrot.lane.b32.xlu0 %v480, 48
          %v487 = vpop.permute.xlu0 %486
          %488 = vrot.lane.b32.xlu0 %v481, 48
          %v489 = vpop.permute.xlu0 %488
          %490 = vrot.lane.b32.xlu0 %v482, 48
          %v491 = vpop.permute.xlu0 %490
          %vm492 = vcmask 392192
          %v493 = vsel %vm492, %v487, %v489
          %v494 = vsel %vm492, %v489, %v491
          %v497 = vadd.f32 %v475, %v493
          %v498 = vadd.f32 %v476, %v494
          %v499 = vstv %s478
          %v500 = vmul.f32 %v499, %v272
          %v501 = vmul.f32 %v499, %v268
          %v502 = vmul.f32 %v499, %v273
          %506 = vrot.lane.b32.xlu0 %v500, 48
          %v507 = vpop.permute.xlu0 %506
          %508 = vrot.lane.b32.xlu0 %v501, 48
          %v509 = vpop.permute.xlu0 %508
          %510 = vrot.lane.b32.xlu0 %v502, 48
          %v511 = vpop.permute.xlu0 %510
          %v512 = vsel %vm492, %v507, %v509
          %v513 = vsel %vm492, %v509, %v511
          %v516 = vadd.f32 %v497, %v512
          %v517 = vadd.f32 %v498, %v513
          %s518 = sld [smem:[#allocation5 + $0x2a]]
          %s519 = sld [smem:[#allocation5 + $0x5b]]
          %v520 = vstv %s518
          %v521 = vmul.f32 %v520, %v260
          %v522 = vmul.f32 %v520, %v256
          %v523 = vmul.f32 %v520, %v261
          %527 = vrot.lane.b32.xlu0 %v521, 32
          %v528 = vpop.permute.xlu0 %527
          %529 = vrot.lane.b32.xlu0 %v522, 32
          %v530 = vpop.permute.xlu0 %529
          %531 = vrot.lane.b32.xlu0 %v523, 32
          %v532 = vpop.permute.xlu0 %531
          %vm533 = vcmask 261120
          %v534 = vsel %vm533, %v528, %v530
          %v535 = vsel %vm533, %v530, %v532
          %v538 = vadd.f32 %v516, %v534
          %v539 = vadd.f32 %v517, %v535
          %v540 = vstv %s519
          %v541 = vmul.f32 %v540, %v272
          %v542 = vmul.f32 %v540, %v268
          %v543 = vmul.f32 %v540, %v273
          %547 = vrot.lane.b32.xlu0 %v541, 32
          %v548 = vpop.permute.xlu0 %547
          %549 = vrot.lane.b32.xlu0 %v542, 32
          %v550 = vpop.permute.xlu0 %549
          %551 = vrot.lane.b32.xlu0 %v543, 32
          %v552 = vpop.permute.xlu0 %551
          %v553 = vsel %vm533, %v548, %v550
          %v554 = vsel %vm533, %v550, %v552
          %v557 = vadd.f32 %v538, %v553
          %v558 = vadd.f32 %v539, %v554
          %vm559 = vcmp.ge.s32.totalorder %v299, 3
          %vm560 = vcmp.ge.s32.totalorder %v300, 3
          %vm561 = vcmp.lt.s32.totalorder %v299, 19
          %vm562 = vcmp.lt.s32.totalorder %v300, 19
          %vm563 = vmand %vm559, %vm561
          %vm564 = vmand %vm560, %vm562
          %v565 = vsel %vm563, %v557, 0.0
          %v566 = vsel %vm564, %v558, 0.0
          %s567 = sld [smem:[#allocation5 + $0x1]]
          %s568 = sld [smem:[#allocation5 + $0x32]]
          %v569 = vstv %s567
          %v570 = vmul.f32 %v569, %v260
          %v571 = vmul.f32 %v569, %v256
          %v572 = vmul.f32 %v569, %v261
          %v573 = vadd.f32 %v570, 0.0
          %v574 = vadd.f32 %v571, 0.0
          %v575 = vadd.f32 %v572, 0.0
          %v576 = vstv %s568
          %v577 = vmul.f32 %v576, %v272
          %v578 = vmul.f32 %v576, %v268
          %v579 = vmul.f32 %v576, %v273
          %v580 = vadd.f32 %v573, %v577
          %v581 = vadd.f32 %v574, %v578
          %v582 = vadd.f32 %v575, %v579
          %s583 = sld [smem:[#allocation5 + $0x8]]
          %s584 = sld [smem:[#allocation5 + $0x39]]
          %v585 = vstv %s583
          %v586 = vmul.f32 %v585, %v260
          %v587 = vmul.f32 %v585, %v256
          %v588 = vmul.f32 %v585, %v261
          %592 = vrot.lane.b32.xlu0 %v586, 112
          %v593 = vpop.permute.xlu0 %592
          %594 = vrot.lane.b32.xlu0 %v587, 112
          %v595 = vpop.permute.xlu0 %594
          %596 = vrot.lane.b32.xlu0 %v588, 112
          %v597 = vpop.permute.xlu0 %596
          %v598 = vsel %vm328, %v593, %v595
          %v599 = vsel %vm328, %v595, %v597
          %v603 = vadd.f32 %v580, %v598
          %v604 = vadd.f32 %v581, %v599
          %v605 = vadd.f32 %v582, %v597
          %v606 = vstv %s584
          %v607 = vmul.f32 %v606, %v272
          %v608 = vmul.f32 %v606, %v268
          %v609 = vmul.f32 %v606, %v273
          %613 = vrot.lane.b32.xlu0 %v607, 112
          %v614 = vpop.permute.xlu0 %613
          %615 = vrot.lane.b32.xlu0 %v608, 112
          %v616 = vpop.permute.xlu0 %615
          %617 = vrot.lane.b32.xlu0 %v609, 112
          %v618 = vpop.permute.xlu0 %617
          %v619 = vsel %vm328, %v614, %v616
          %v620 = vsel %vm328, %v616, %v618
          %v624 = vadd.f32 %v603, %v619
          %v625 = vadd.f32 %v604, %v620
          %v626 = vadd.f32 %v605, %v618
          %s627 = sld [smem:[#allocation5 + $0xf]]
          %s628 = sld [smem:[#allocation5 + $0x40]]
          %v629 = vstv %s627
          %v630 = vmul.f32 %v629, %v260
          %v631 = vmul.f32 %v629, %v256
          %v632 = vmul.f32 %v629, %v261
          %636 = vrot.lane.b32.xlu0 %v630, 96
          %v637 = vpop.permute.xlu0 %636
          %638 = vrot.lane.b32.xlu0 %v631, 96
          %v639 = vpop.permute.xlu0 %638
          %640 = vrot.lane.b32.xlu0 %v632, 96
          %v641 = vpop.permute.xlu0 %640
          %v642 = vsel %vm369, %v637, %v639
          %v643 = vsel %vm369, %v639, %v641
          %v647 = vadd.f32 %v624, %v642
          %v648 = vadd.f32 %v625, %v643
          %v649 = vadd.f32 %v626, %v641
          %v650 = vstv %s628
          %v651 = vmul.f32 %v650, %v272
          %v652 = vmul.f32 %v650, %v268
          %v653 = vmul.f32 %v650, %v273
          %657 = vrot.lane.b32.xlu0 %v651, 96
          %v658 = vpop.permute.xlu0 %657
          %659 = vrot.lane.b32.xlu0 %v652, 96
          %v660 = vpop.permute.xlu0 %659
          %661 = vrot.lane.b32.xlu0 %v653, 96
          %v662 = vpop.permute.xlu0 %661
          %v663 = vsel %vm369, %v658, %v660
          %v664 = vsel %vm369, %v660, %v662
          %v668 = vadd.f32 %v647, %v663
          %v669 = vadd.f32 %v648, %v664
          %v670 = vadd.f32 %v649, %v662
          %s671 = sld [smem:[#allocation5 + $0x16]]
          %s672 = sld [smem:[#allocation5 + $0x47]]
          %v673 = vstv %s671
          %v674 = vmul.f32 %v673, %v260
          %v675 = vmul.f32 %v673, %v256
          %v676 = vmul.f32 %v673, %v261
          %680 = vrot.lane.b32.xlu0 %v674, 80
          %v681 = vpop.permute.xlu0 %680
          %682 = vrot.lane.b32.xlu0 %v675, 80
          %v683 = vpop.permute.xlu0 %682
          %684 = vrot.lane.b32.xlu0 %v676, 80
          %v685 = vpop.permute.xlu0 %684
          %v686 = vsel %vm410, %v681, %v683
          %v687 = vsel %vm410, %v683, %v685
          %v691 = vadd.f32 %v668, %v686
          %v692 = vadd.f32 %v669, %v687
          %v693 = vadd.f32 %v670, %v685
          %v694 = vstv %s672
          %v695 = vmul.f32 %v694, %v272
          %v696 = vmul.f32 %v694, %v268
          %v697 = vmul.f32 %v694, %v273
          %701 = vrot.lane.b32.xlu0 %v695, 80
          %v702 = vpop.permute.xlu0 %701
          %703 = vrot.lane.b32.xlu0 %v696, 80
          %v704 = vpop.permute.xlu0 %703
          %705 = vrot.lane.b32.xlu0 %v697, 80
          %v706 = vpop.permute.xlu0 %705
          %v707 = vsel %vm410, %v702, %v704
          %v708 = vsel %vm410, %v704, %v706
          %v712 = vadd.f32 %v691, %v707
          %v713 = vadd.f32 %v692, %v708
          %v714 = vadd.f32 %v693, %v706
          %s715 = sld [smem:[#allocation5 + $0x1d]]
          %s716 = sld [smem:[#allocation5 + $0x4e]]
          %v717 = vstv %s715
          %v718 = vmul.f32 %v717, %v260
          %v719 = vmul.f32 %v717, %v256
          %v720 = vmul.f32 %v717, %v261
          %724 = vrot.lane.b32.xlu0 %v718, 64
          %v725 = vpop.permute.xlu0 %724
          %726 = vrot.lane.b32.xlu0 %v719, 64
          %v727 = vpop.permute.xlu0 %726
          %728 = vrot.lane.b32.xlu0 %v720, 64
          %v729 = vpop.permute.xlu0 %728
          %v730 = vsel %vm451, %v725, %v727
          %v731 = vsel %vm451, %v727, %v729
          %v735 = vadd.f32 %v712, %v730
          %v736 = vadd.f32 %v713, %v731
          %v737 = vadd.f32 %v714, %v729
          %v738 = vstv %s716
          %v739 = vmul.f32 %v738, %v272
          %v740 = vmul.f32 %v738, %v268
          %v741 = vmul.f32 %v738, %v273
          %745 = vrot.lane.b32.xlu0 %v739, 64
          %v746 = vpop.permute.xlu0 %745
          %747 = vrot.lane.b32.xlu0 %v740, 64
          %v748 = vpop.permute.xlu0 %747
          %749 = vrot.lane.b32.xlu0 %v741, 64
          %v750 = vpop.permute.xlu0 %749
          %v751 = vsel %vm451, %v746, %v748
          %v752 = vsel %vm451, %v748, %v750
          %v756 = vadd.f32 %v735, %v751
          %v757 = vadd.f32 %v736, %v752
          %v758 = vadd.f32 %v737, %v750
          %s759 = sld [smem:[#allocation5 + $0x24]]
          %s760 = sld [smem:[#allocation5 + $0x55]]
          %v761 = vstv %s759
          %v762 = vmul.f32 %v761, %v260
          %v763 = vmul.f32 %v761, %v256
          %v764 = vmul.f32 %v761, %v261
          %768 = vrot.lane.b32.xlu0 %v762, 48
          %v769 = vpop.permute.xlu0 %768
          %770 = vrot.lane.b32.xlu0 %v763, 48
          %v771 = vpop.permute.xlu0 %770
          %772 = vrot.lane.b32.xlu0 %v764, 48
          %v773 = vpop.permute.xlu0 %772
          %v774 = vsel %vm492, %v769, %v771
          %v775 = vsel %vm492, %v771, %v773
          %v779 = vadd.f32 %v756, %v774
          %v780 = vadd.f32 %v757, %v775
          %v781 = vadd.f32 %v758, %v773
          %v782 = vstv %s760
          %v783 = vmul.f32 %v782, %v272
          %v784 = vmul.f32 %v782, %v268
          %v785 = vmul.f32 %v782, %v273
          %789 = vrot.lane.b32.xlu0 %v783, 48
          %v790 = vpop.permute.xlu0 %789
          %791 = vrot.lane.b32.xlu0 %v784, 48
          %v792 = vpop.permute.xlu0 %791
          %793 = vrot.lane.b32.xlu0 %v785, 48
          %v794 = vpop.permute.xlu0 %793
          %v795 = vsel %vm492, %v790, %v792
          %v796 = vsel %vm492, %v792, %v794
          %v800 = vadd.f32 %v779, %v795
          %v801 = vadd.f32 %v780, %v796
          %v802 = vadd.f32 %v781, %v794
          %s803 = sld [smem:[#allocation5 + $0x2b]]
          %s804 = sld [smem:[#allocation5 + $0x5c]]
          %v805 = vstv %s803
          %v806 = vmul.f32 %v805, %v260
          %v807 = vmul.f32 %v805, %v256
          %v808 = vmul.f32 %v805, %v261
          %812 = vrot.lane.b32.xlu0 %v806, 32
          %v813 = vpop.permute.xlu0 %812
          %814 = vrot.lane.b32.xlu0 %v807, 32
          %v815 = vpop.permute.xlu0 %814
          %816 = vrot.lane.b32.xlu0 %v808, 32
          %v817 = vpop.permute.xlu0 %816
          %v818 = vsel %vm533, %v813, %v815
          %v819 = vsel %vm533, %v815, %v817
          %v823 = vadd.f32 %v800, %v818
          %v824 = vadd.f32 %v801, %v819
          %v825 = vadd.f32 %v802, %v817
          %v826 = vstv %s804
          %v827 = vmul.f32 %v826, %v272
          %v828 = vmul.f32 %v826, %v268
          %v829 = vmul.f32 %v826, %v273
          %833 = vrot.lane.b32.xlu0 %v827, 32
          %v834 = vpop.permute.xlu0 %833
          %835 = vrot.lane.b32.xlu0 %v828, 32
          %v836 = vpop.permute.xlu0 %835
          %837 = vrot.lane.b32.xlu0 %v829, 32
          %v838 = vpop.permute.xlu0 %837
          %v839 = vsel %vm533, %v834, %v836
          %v840 = vsel %vm533, %v836, %v838
          %v844 = vadd.f32 %v823, %v839
          %v845 = vadd.f32 %v824, %v840
          %v846 = vadd.f32 %v825, %v838
          %vm847 = vcmp.ge.s32.totalorder %v299, 2
          %vm848 = vcmp.ge.s32.totalorder %v300, 2
          %vm849 = vcmp.lt.s32.totalorder %v299, 18
          %vm850 = vcmp.lt.s32.totalorder %v300, 18
          %vm851 = vmand %vm847, %vm849
          %vm852 = vmand %vm848, %vm850
          %856 = vrot.lane.b32.xlu0 %v844, 127
          %v857 = vpop.permute.xlu0 %856
          %858 = vrot.lane.b32.xlu0 %v845, 127
          %v859 = vpop.permute.xlu0 %858
          %860 = vrot.lane.b32.xlu0 %v846, 127
          %v861 = vpop.permute.xlu0 %860
          %vm862 = vcmask 1039360
          %v863 = vsel %vm862, %v857, %v859
          %v864 = vsel %vm862, %v859, %v861
          %v867 = vsel %vm851, %v863, 0.0
          %v868 = vsel %vm852, %v864, 0.0
          %s869 = sld [smem:[#allocation5 + $0x2]]
          %s870 = sld [smem:[#allocation5 + $0x33]]
          %v871 = vstv %s869
          %v872 = vmul.f32 %v871, %v260
          %v873 = vmul.f32 %v871, %v256
          %v874 = vmul.f32 %v871, %v261
          %v875 = vadd.f32 %v872, 0.0
          %v876 = vadd.f32 %v873, 0.0
          %v877 = vadd.f32 %v874, 0.0
          %v878 = vstv %s870
          %v879 = vmul.f32 %v878, %v272
          %v880 = vmul.f32 %v878, %v268
          %v881 = vmul.f32 %v878, %v273
          %v882 = vadd.f32 %v875, %v879
          %v883 = vadd.f32 %v876, %v880
          %v884 = vadd.f32 %v877, %v881
          %s885 = sld [smem:[#allocation5 + $0x9]]
          %s886 = sld [smem:[#allocation5 + $0x3a]]
          %v887 = vstv %s885
          %v888 = vmul.f32 %v887, %v260
          %v889 = vmul.f32 %v887, %v256
          %v890 = vmul.f32 %v887, %v261
          %894 = vrot.lane.b32.xlu0 %v888, 112
          %v895 = vpop.permute.xlu0 %894
          %896 = vrot.lane.b32.xlu0 %v889, 112
          %v897 = vpop.permute.xlu0 %896
          %898 = vrot.lane.b32.xlu0 %v890, 112
          %v899 = vpop.permute.xlu0 %898
          %v900 = vsel %vm328, %v895, %v897
          %v901 = vsel %vm328, %v897, %v899
          %v905 = vadd.f32 %v882, %v900
          %v906 = vadd.f32 %v883, %v901
          %v907 = vadd.f32 %v884, %v899
          %v908 = vstv %s886
          %v909 = vmul.f32 %v908, %v272
          %v910 = vmul.f32 %v908, %v268
          %v911 = vmul.f32 %v908, %v273
          %915 = vrot.lane.b32.xlu0 %v909, 112
          %v916 = vpop.permute.xlu0 %915
          %917 = vrot.lane.b32.xlu0 %v910, 112
          %v918 = vpop.permute.xlu0 %917
          %919 = vrot.lane.b32.xlu0 %v911, 112
          %v920 = vpop.permute.xlu0 %919
          %v921 = vsel %vm328, %v916, %v918
          %v922 = vsel %vm328, %v918, %v920
          %v926 = vadd.f32 %v905, %v921
          %v927 = vadd.f32 %v906, %v922
          %v928 = vadd.f32 %v907, %v920
          %s929 = sld [smem:[#allocation5 + $0x10]]
          %s930 = sld [smem:[#allocation5 + $0x41]]
          %v931 = vstv %s929
          %v932 = vmul.f32 %v931, %v260
          %v933 = vmul.f32 %v931, %v256
          %v934 = vmul.f32 %v931, %v261
          %938 = vrot.lane.b32.xlu0 %v932, 96
          %v939 = vpop.permute.xlu0 %938
          %940 = vrot.lane.b32.xlu0 %v933, 96
          %v941 = vpop.permute.xlu0 %940
          %942 = vrot.lane.b32.xlu0 %v934, 96
          %v943 = vpop.permute.xlu0 %942
          %v944 = vsel %vm369, %v939, %v941
          %v945 = vsel %vm369, %v941, %v943
          %v949 = vadd.f32 %v926, %v944
          %v950 = vadd.f32 %v927, %v945
          %v951 = vadd.f32 %v928, %v943
          %v952 = vstv %s930
          %v953 = vmul.f32 %v952, %v272
          %v954 = vmul.f32 %v952, %v268
          %v955 = vmul.f32 %v952, %v273
          %959 = vrot.lane.b32.xlu0 %v953, 96
          %v960 = vpop.permute.xlu0 %959
          %961 = vrot.lane.b32.xlu0 %v954, 96
          %v962 = vpop.permute.xlu0 %961
          %963 = vrot.lane.b32.xlu0 %v955, 96
          %v964 = vpop.permute.xlu0 %963
          %v965 = vsel %vm369, %v960, %v962
          %v966 = vsel %vm369, %v962, %v964
          %v970 = vadd.f32 %v949, %v965
          %v971 = vadd.f32 %v950, %v966
          %v972 = vadd.f32 %v951, %v964
          %s973 = sld [smem:[#allocation5 + $0x17]]
          %s974 = sld [smem:[#allocation5 + $0x48]]
          %v975 = vstv %s973
          %v976 = vmul.f32 %v975, %v260
          %v977 = vmul.f32 %v975, %v256
          %v978 = vmul.f32 %v975, %v261
          %982 = vrot.lane.b32.xlu0 %v976, 80
          %v983 = vpop.permute.xlu0 %982
          %984 = vrot.lane.b32.xlu0 %v977, 80
          %v985 = vpop.permute.xlu0 %984
          %986 = vrot.lane.b32.xlu0 %v978, 80
          %v987 = vpop.permute.xlu0 %986
          %v988 = vsel %vm410, %v983, %v985
          %v989 = vsel %vm410, %v985, %v987
          %v993 = vadd.f32 %v970, %v988
          %v994 = vadd.f32 %v971, %v989
          %v995 = vadd.f32 %v972, %v987
          %v996 = vstv %s974
          %v997 = vmul.f32 %v996, %v272
          %v998 = vmul.f32 %v996, %v268
          %v999 = vmul.f32 %v996, %v273
          %1003 = vrot.lane.b32.xlu0 %v997, 80
          %v1004 = vpop.permute.xlu0 %1003
          %1005 = vrot.lane.b32.xlu0 %v998, 80
          %v1006 = vpop.permute.xlu0 %1005
          %1007 = vrot.lane.b32.xlu0 %v999, 80
          %v1008 = vpop.permute.xlu0 %1007
          %v1009 = vsel %vm410, %v1004, %v1006
          %v1010 = vsel %vm410, %v1006, %v1008
          %v1014 = vadd.f32 %v993, %v1009
          %v1015 = vadd.f32 %v994, %v1010
          %v1016 = vadd.f32 %v995, %v1008
          %s1017 = sld [smem:[#allocation5 + $0x1e]]
          %s1018 = sld [smem:[#allocation5 + $0x4f]]
          %v1019 = vstv %s1017
          %v1020 = vmul.f32 %v1019, %v260
          %v1021 = vmul.f32 %v1019, %v256
          %v1022 = vmul.f32 %v1019, %v261
          %1026 = vrot.lane.b32.xlu0 %v1020, 64
          %v1027 = vpop.permute.xlu0 %1026
          %1028 = vrot.lane.b32.xlu0 %v1021, 64
          %v1029 = vpop.permute.xlu0 %1028
          %1030 = vrot.lane.b32.xlu0 %v1022, 64
          %v1031 = vpop.permute.xlu0 %1030
          %v1032 = vsel %vm451, %v1027, %v1029
          %v1033 = vsel %vm451, %v1029, %v1031
          %v1037 = vadd.f32 %v1014, %v1032
          %v1038 = vadd.f32 %v1015, %v1033
          %v1039 = vadd.f32 %v1016, %v1031
          %v1040 = vstv %s1018
          %v1041 = vmul.f32 %v1040, %v272
          %v1042 = vmul.f32 %v1040, %v268
          %v1043 = vmul.f32 %v1040, %v273
          %1047 = vrot.lane.b32.xlu0 %v1041, 64
          %v1048 = vpop.permute.xlu0 %1047
          %1049 = vrot.lane.b32.xlu0 %v1042, 64
          %v1050 = vpop.permute.xlu0 %1049
          %1051 = vrot.lane.b32.xlu0 %v1043, 64
          %v1052 = vpop.permute.xlu0 %1051
          %v1053 = vsel %vm451, %v1048, %v1050
          %v1054 = vsel %vm451, %v1050, %v1052
          %v1058 = vadd.f32 %v1037, %v1053
          %v1059 = vadd.f32 %v1038, %v1054
          %v1060 = vadd.f32 %v1039, %v1052
          %s1061 = sld [smem:[#allocation5 + $0x25]]
          %s1062 = sld [smem:[#allocation5 + $0x56]]
          %v1063 = vstv %s1061
          %v1064 = vmul.f32 %v1063, %v260
          %v1065 = vmul.f32 %v1063, %v256
          %v1066 = vmul.f32 %v1063, %v261
          %1070 = vrot.lane.b32.xlu0 %v1064, 48
          %v1071 = vpop.permute.xlu0 %1070
          %1072 = vrot.lane.b32.xlu0 %v1065, 48
          %v1073 = vpop.permute.xlu0 %1072
          %1074 = vrot.lane.b32.xlu0 %v1066, 48
          %v1075 = vpop.permute.xlu0 %1074
          %v1076 = vsel %vm492, %v1071, %v1073
          %v1077 = vsel %vm492, %v1073, %v1075
          %v1081 = vadd.f32 %v1058, %v1076
          %v1082 = vadd.f32 %v1059, %v1077
          %v1083 = vadd.f32 %v1060, %v1075
          %v1084 = vstv %s1062
          %v1085 = vmul.f32 %v1084, %v272
          %v1086 = vmul.f32 %v1084, %v268
          %v1087 = vmul.f32 %v1084, %v273
          %1091 = vrot.lane.b32.xlu0 %v1085, 48
          %v1092 = vpop.permute.xlu0 %1091
          %1093 = vrot.lane.b32.xlu0 %v1086, 48
          %v1094 = vpop.permute.xlu0 %1093
          %1095 = vrot.lane.b32.xlu0 %v1087, 48
          %v1096 = vpop.permute.xlu0 %1095
          %v1097 = vsel %vm492, %v1092, %v1094
          %v1098 = vsel %vm492, %v1094, %v1096
          %v1102 = vadd.f32 %v1081, %v1097
          %v1103 = vadd.f32 %v1082, %v1098
          %v1104 = vadd.f32 %v1083, %v1096
          %s1105 = sld [smem:[#allocation5 + $0x2c]]
          %s1106 = sld [smem:[#allocation5 + $0x5d]]
          %v1107 = vstv %s1105
          %v1108 = vmul.f32 %v1107, %v260
          %v1109 = vmul.f32 %v1107, %v256
          %v1110 = vmul.f32 %v1107, %v261
          %1114 = vrot.lane.b32.xlu0 %v1108, 32
          %v1115 = vpop.permute.xlu0 %1114
          %1116 = vrot.lane.b32.xlu0 %v1109, 32
          %v1117 = vpop.permute.xlu0 %1116
          %1118 = vrot.lane.b32.xlu0 %v1110, 32
          %v1119 = vpop.permute.xlu0 %1118
          %v1120 = vsel %vm533, %v1115, %v1117
          %v1121 = vsel %vm533, %v1117, %v1119
          %v1125 = vadd.f32 %v1102, %v1120
          %v1126 = vadd.f32 %v1103, %v1121
          %v1127 = vadd.f32 %v1104, %v1119
          %v1128 = vstv %s1106
          %v1129 = vmul.f32 %v1128, %v272
          %v1130 = vmul.f32 %v1128, %v268
          %v1131 = vmul.f32 %v1128, %v273
          %1135 = vrot.lane.b32.xlu0 %v1129, 32
          %v1136 = vpop.permute.xlu0 %1135
          %1137 = vrot.lane.b32.xlu0 %v1130, 32
          %v1138 = vpop.permute.xlu0 %1137
          %1139 = vrot.lane.b32.xlu0 %v1131, 32
          %v1140 = vpop.permute.xlu0 %1139
          %v1141 = vsel %vm533, %v1136, %v1138
          %v1142 = vsel %vm533, %v1138, %v1140
          %v1146 = vadd.f32 %v1125, %v1141
          %v1147 = vadd.f32 %v1126, %v1142
          %v1148 = vadd.f32 %v1127, %v1140
          %vm1149 = vcmp.ge.s32.totalorder %v299, 1
          %vm1150 = vcmp.ge.s32.totalorder %v300, 1
          %vm1151 = vcmp.lt.s32.totalorder %v299, 17
          %vm1152 = vcmp.lt.s32.totalorder %v300, 17
          %vm1153 = vmand %vm1149, %vm1151
          %vm1154 = vmand %vm1150, %vm1152
          %1158 = vrot.lane.b32.xlu0 %v1146, 126
          %v1159 = vpop.permute.xlu0 %1158
          %1160 = vrot.lane.b32.xlu0 %v1147, 126
          %v1161 = vpop.permute.xlu0 %1160
          %1162 = vrot.lane.b32.xlu0 %v1148, 126
          %v1163 = vpop.permute.xlu0 %1162
          %vm1164 = vcmask 1031168
          %v1165 = vsel %vm1164, %v1159, %v1161
          %v1166 = vsel %vm1164, %v1161, %v1163
          %v1169 = vsel %vm1153, %v1165, 0.0
          %v1170 = vsel %vm1154, %v1166, 0.0
          %s1171 = sld [smem:[#allocation5 + $0x3]]
          %s1172 = sld [smem:[#allocation5 + $0x34]]
          %v1173 = vstv %s1171
          %v1174 = vmul.f32 %v1173, %v260
          %v1175 = vmul.f32 %v1173, %v256
          %v1176 = vmul.f32 %v1173, %v261
          %v1177 = vadd.f32 %v1174, 0.0
          %v1178 = vadd.f32 %v1175, 0.0
          %v1179 = vadd.f32 %v1176, 0.0
          %v1180 = vstv %s1172
          %v1181 = vmul.f32 %v1180, %v272
          %v1182 = vmul.f32 %v1180, %v268
          %v1183 = vmul.f32 %v1180, %v273
          %v1184 = vadd.f32 %v1177, %v1181
          %v1185 = vadd.f32 %v1178, %v1182
          %v1186 = vadd.f32 %v1179, %v1183
          %s1187 = sld [smem:[#allocation5 + $0xa]]
          %s1188 = sld [smem:[#allocation5 + $0x3b]]
          %v1189 = vstv %s1187
          %v1190 = vmul.f32 %v1189, %v260
          %v1191 = vmul.f32 %v1189, %v256
          %v1192 = vmul.f32 %v1189, %v261
          %1196 = vrot.lane.b32.xlu0 %v1190, 112
          %v1197 = vpop.permute.xlu0 %1196
          %1198 = vrot.lane.b32.xlu0 %v1191, 112
          %v1199 = vpop.permute.xlu0 %1198
          %1200 = vrot.lane.b32.xlu0 %v1192, 112
          %v1201 = vpop.permute.xlu0 %1200
          %v1202 = vsel %vm328, %v1197, %v1199
          %v1203 = vsel %vm328, %v1199, %v1201
          %v1207 = vadd.f32 %v1184, %v1202
          %v1208 = vadd.f32 %v1185, %v1203
          %v1209 = vadd.f32 %v1186, %v1201
          %v1210 = vstv %s1188
          %v1211 = vmul.f32 %v1210, %v272
          %v1212 = vmul.f32 %v1210, %v268
          %v1213 = vmul.f32 %v1210, %v273
          %1217 = vrot.lane.b32.xlu0 %v1211, 112
          %v1218 = vpop.permute.xlu0 %1217
          %1219 = vrot.lane.b32.xlu0 %v1212, 112
          %v1220 = vpop.permute.xlu0 %1219
          %1221 = vrot.lane.b32.xlu0 %v1213, 112
          %v1222 = vpop.permute.xlu0 %1221
          %v1223 = vsel %vm328, %v1218, %v1220
          %v1224 = vsel %vm328, %v1220, %v1222
          %v1228 = vadd.f32 %v1207, %v1223
          %v1229 = vadd.f32 %v1208, %v1224
          %v1230 = vadd.f32 %v1209, %v1222
          %s1231 = sld [smem:[#allocation5 + $0x11]]
          %s1232 = sld [smem:[#allocation5 + $0x42]]
          %v1233 = vstv %s1231
          %v1234 = vmul.f32 %v1233, %v260
          %v1235 = vmul.f32 %v1233, %v256
          %v1236 = vmul.f32 %v1233, %v261
          %1240 = vrot.lane.b32.xlu0 %v1234, 96
          %v1241 = vpop.permute.xlu0 %1240
          %1242 = vrot.lane.b32.xlu0 %v1235, 96
          %v1243 = vpop.permute.xlu0 %1242
          %1244 = vrot.lane.b32.xlu0 %v1236, 96
          %v1245 = vpop.permute.xlu0 %1244
          %v1246 = vsel %vm369, %v1241, %v1243
          %v1247 = vsel %vm369, %v1243, %v1245
          %v1251 = vadd.f32 %v1228, %v1246
          %v1252 = vadd.f32 %v1229, %v1247
          %v1253 = vadd.f32 %v1230, %v1245
          %v1254 = vstv %s1232
          %v1255 = vmul.f32 %v1254, %v272
          %v1256 = vmul.f32 %v1254, %v268
          %v1257 = vmul.f32 %v1254, %v273
          %1261 = vrot.lane.b32.xlu0 %v1255, 96
          %v1262 = vpop.permute.xlu0 %1261
          %1263 = vrot.lane.b32.xlu0 %v1256, 96
          %v1264 = vpop.permute.xlu0 %1263
          %1265 = vrot.lane.b32.xlu0 %v1257, 96
          %v1266 = vpop.permute.xlu0 %1265
          %v1267 = vsel %vm369, %v1262, %v1264
          %v1268 = vsel %vm369, %v1264, %v1266
          %v1272 = vadd.f32 %v1251, %v1267
          %v1273 = vadd.f32 %v1252, %v1268
          %v1274 = vadd.f32 %v1253, %v1266
          %s1275 = sld [smem:[#allocation5 + $0x18]]
          %s1276 = sld [smem:[#allocation5 + $0x49]]
          %v1277 = vstv %s1275
          %v1278 = vmul.f32 %v1277, %v260
          %v1279 = vmul.f32 %v1277, %v256
          %v1280 = vmul.f32 %v1277, %v261
          %1284 = vrot.lane.b32.xlu0 %v1278, 80
          %v1285 = vpop.permute.xlu0 %1284
          %1286 = vrot.lane.b32.xlu0 %v1279, 80
          %v1287 = vpop.permute.xlu0 %1286
          %1288 = vrot.lane.b32.xlu0 %v1280, 80
          %v1289 = vpop.permute.xlu0 %1288
          %v1290 = vsel %vm410, %v1285, %v1287
          %v1291 = vsel %vm410, %v1287, %v1289
          %v1295 = vadd.f32 %v1272, %v1290
          %v1296 = vadd.f32 %v1273, %v1291
          %v1297 = vadd.f32 %v1274, %v1289
          %v1298 = vstv %s1276
          %v1299 = vmul.f32 %v1298, %v272
          %v1300 = vmul.f32 %v1298, %v268
          %v1301 = vmul.f32 %v1298, %v273
          %1305 = vrot.lane.b32.xlu0 %v1299, 80
          %v1306 = vpop.permute.xlu0 %1305
          %1307 = vrot.lane.b32.xlu0 %v1300, 80
          %v1308 = vpop.permute.xlu0 %1307
          %1309 = vrot.lane.b32.xlu0 %v1301, 80
          %v1310 = vpop.permute.xlu0 %1309
          %v1311 = vsel %vm410, %v1306, %v1308
          %v1312 = vsel %vm410, %v1308, %v1310
          %v1316 = vadd.f32 %v1295, %v1311
          %v1317 = vadd.f32 %v1296, %v1312
          %v1318 = vadd.f32 %v1297, %v1310
          %s1319 = sld [smem:[#allocation5 + $0x1f]]
          %s1320 = sld [smem:[#allocation5 + $0x50]]
          %v1321 = vstv %s1319
          %v1322 = vmul.f32 %v1321, %v260
          %v1323 = vmul.f32 %v1321, %v256
          %v1324 = vmul.f32 %v1321, %v261
          %1328 = vrot.lane.b32.xlu0 %v1322, 64
          %v1329 = vpop.permute.xlu0 %1328
          %1330 = vrot.lane.b32.xlu0 %v1323, 64
          %v1331 = vpop.permute.xlu0 %1330
          %1332 = vrot.lane.b32.xlu0 %v1324, 64
          %v1333 = vpop.permute.xlu0 %1332
          %v1334 = vsel %vm451, %v1329, %v1331
          %v1335 = vsel %vm451, %v1331, %v1333
          %v1339 = vadd.f32 %v1316, %v1334
          %v1340 = vadd.f32 %v1317, %v1335
          %v1341 = vadd.f32 %v1318, %v1333
          %v1342 = vstv %s1320
          %v1343 = vmul.f32 %v1342, %v272
          %v1344 = vmul.f32 %v1342, %v268
          %v1345 = vmul.f32 %v1342, %v273
          %1349 = vrot.lane.b32.xlu0 %v1343, 64
          %v1350 = vpop.permute.xlu0 %1349
          %1351 = vrot.lane.b32.xlu0 %v1344, 64
          %v1352 = vpop.permute.xlu0 %1351
          %1353 = vrot.lane.b32.xlu0 %v1345, 64
          %v1354 = vpop.permute.xlu0 %1353
          %v1355 = vsel %vm451, %v1350, %v1352
          %v1356 = vsel %vm451, %v1352, %v1354
          %v1360 = vadd.f32 %v1339, %v1355
          %v1361 = vadd.f32 %v1340, %v1356
          %v1362 = vadd.f32 %v1341, %v1354
          %s1363 = sld [smem:[#allocation5 + $0x26]]
          %s1364 = sld [smem:[#allocation5 + $0x57]]
          %v1365 = vstv %s1363
          %v1366 = vmul.f32 %v1365, %v260
          %v1367 = vmul.f32 %v1365, %v256
          %v1368 = vmul.f32 %v1365, %v261
          %1372 = vrot.lane.b32.xlu0 %v1366, 48
          %v1373 = vpop.permute.xlu0 %1372
          %1374 = vrot.lane.b32.xlu0 %v1367, 48
          %v1375 = vpop.permute.xlu0 %1374
          %1376 = vrot.lane.b32.xlu0 %v1368, 48
          %v1377 = vpop.permute.xlu0 %1376
          %v1378 = vsel %vm492, %v1373, %v1375
          %v1379 = vsel %vm492, %v1375, %v1377
          %v1383 = vadd.f32 %v1360, %v1378
          %v1384 = vadd.f32 %v1361, %v1379
          %v1385 = vadd.f32 %v1362, %v1377
          %v1386 = vstv %s1364
          %v1387 = vmul.f32 %v1386, %v272
          %v1388 = vmul.f32 %v1386, %v268
          %v1389 = vmul.f32 %v1386, %v273
          %1393 = vrot.lane.b32.xlu0 %v1387, 48
          %v1394 = vpop.permute.xlu0 %1393
          %1395 = vrot.lane.b32.xlu0 %v1388, 48
          %v1396 = vpop.permute.xlu0 %1395
          %1397 = vrot.lane.b32.xlu0 %v1389, 48
          %v1398 = vpop.permute.xlu0 %1397
          %v1399 = vsel %vm492, %v1394, %v1396
          %v1400 = vsel %vm492, %v1396, %v1398
          %v1404 = vadd.f32 %v1383, %v1399
          %v1405 = vadd.f32 %v1384, %v1400
          %v1406 = vadd.f32 %v1385, %v1398
          %s1407 = sld [smem:[#allocation5 + $0x2d]]
          %s1408 = sld [smem:[#allocation5 + $0x5e]]
          %v1409 = vstv %s1407
          %v1410 = vmul.f32 %v1409, %v260
          %v1411 = vmul.f32 %v1409, %v256
          %v1412 = vmul.f32 %v1409, %v261
          %1416 = vrot.lane.b32.xlu0 %v1410, 32
          %v1417 = vpop.permute.xlu0 %1416
          %1418 = vrot.lane.b32.xlu0 %v1411, 32
          %v1419 = vpop.permute.xlu0 %1418
          %1420 = vrot.lane.b32.xlu0 %v1412, 32
          %v1421 = vpop.permute.xlu0 %1420
          %v1422 = vsel %vm533, %v1417, %v1419
          %v1423 = vsel %vm533, %v1419, %v1421
          %v1427 = vadd.f32 %v1404, %v1422
          %v1428 = vadd.f32 %v1405, %v1423
          %v1429 = vadd.f32 %v1406, %v1421
          %v1430 = vstv %s1408
          %v1431 = vmul.f32 %v1430, %v272
          %v1432 = vmul.f32 %v1430, %v268
          %v1433 = vmul.f32 %v1430, %v273
          %1437 = vrot.lane.b32.xlu0 %v1431, 32
          %v1438 = vpop.permute.xlu0 %1437
          %1439 = vrot.lane.b32.xlu0 %v1432, 32
          %v1440 = vpop.permute.xlu0 %1439
          %1441 = vrot.lane.b32.xlu0 %v1433, 32
          %v1442 = vpop.permute.xlu0 %1441
          %v1443 = vsel %vm533, %v1438, %v1440
          %v1444 = vsel %vm533, %v1440, %v1442
          %v1448 = vadd.f32 %v1427, %v1443
          %v1449 = vadd.f32 %v1428, %v1444
          %v1450 = vadd.f32 %v1429, %v1442
          %s1451 = sld [smem:[#allocation5 + $0x4]]
          %s1452 = sld [smem:[#allocation5 + $0x35]]
          %v1453 = vstv %s1451
          %v1454 = vmul.f32 %v1453, %v260
          %v1455 = vmul.f32 %v1453, %v256
          %v1456 = vmul.f32 %v1453, %v261
          %v1457 = vadd.f32 %v1454, 0.0
          %v1458 = vadd.f32 %v1455, 0.0
          %v1459 = vadd.f32 %v1456, 0.0
          %v1460 = vstv %s1452
          %v1461 = vmul.f32 %v1460, %v272
          %v1462 = vmul.f32 %v1460, %v268
          %v1463 = vmul.f32 %v1460, %v273
          %v1464 = vadd.f32 %v1457, %v1461
          %v1465 = vadd.f32 %v1458, %v1462
          %v1466 = vadd.f32 %v1459, %v1463
          %s1467 = sld [smem:[#allocation5 + $0xb]]
          %s1468 = sld [smem:[#allocation5 + $0x3c]]
          %v1469 = vstv %s1467
          %v1470 = vmul.f32 %v1469, %v260
          %v1471 = vmul.f32 %v1469, %v256
          %v1472 = vmul.f32 %v1469, %v261
          %1476 = vrot.lane.b32.xlu0 %v1470, 112
          %v1477 = vpop.permute.xlu0 %1476
          %1478 = vrot.lane.b32.xlu0 %v1471, 112
          %v1479 = vpop.permute.xlu0 %1478
          %1480 = vrot.lane.b32.xlu0 %v1472, 112
          %v1481 = vpop.permute.xlu0 %1480
          %v1482 = vsel %vm328, %v1477, %v1479
          %v1483 = vsel %vm328, %v1479, %v1481
          %v1487 = vadd.f32 %v1464, %v1482
          %v1488 = vadd.f32 %v1465, %v1483
          %v1489 = vadd.f32 %v1466, %v1481
          %v1490 = vstv %s1468
          %v1491 = vmul.f32 %v1490, %v272
          %v1492 = vmul.f32 %v1490, %v268
          %v1493 = vmul.f32 %v1490, %v273
          %1497 = vrot.lane.b32.xlu0 %v1491, 112
          %v1498 = vpop.permute.xlu0 %1497
          %1499 = vrot.lane.b32.xlu0 %v1492, 112
          %v1500 = vpop.permute.xlu0 %1499
          %1501 = vrot.lane.b32.xlu0 %v1493, 112
          %v1502 = vpop.permute.xlu0 %1501
          %v1503 = vsel %vm328, %v1498, %v1500
          %v1504 = vsel %vm328, %v1500, %v1502
          %v1508 = vadd.f32 %v1487, %v1503
          %v1509 = vadd.f32 %v1488, %v1504
          %v1510 = vadd.f32 %v1489, %v1502
          %s1511 = sld [smem:[#allocation5 + $0x12]]
          %s1512 = sld [smem:[#allocation5 + $0x43]]
          %v1513 = vstv %s1511
          %v1514 = vmul.f32 %v1513, %v260
          %v1515 = vmul.f32 %v1513, %v256
          %v1516 = vmul.f32 %v1513, %v261
          %1520 = vrot.lane.b32.xlu0 %v1514, 96
          %v1521 = vpop.permute.xlu0 %1520
          %1522 = vrot.lane.b32.xlu0 %v1515, 96
          %v1523 = vpop.permute.xlu0 %1522
          %1524 = vrot.lane.b32.xlu0 %v1516, 96
          %v1525 = vpop.permute.xlu0 %1524
          %v1526 = vsel %vm369, %v1521, %v1523
          %v1527 = vsel %vm369, %v1523, %v1525
          %v1531 = vadd.f32 %v1508, %v1526
          %v1532 = vadd.f32 %v1509, %v1527
          %v1533 = vadd.f32 %v1510, %v1525
          %v1534 = vstv %s1512
          %v1535 = vmul.f32 %v1534, %v272
          %v1536 = vmul.f32 %v1534, %v268
          %v1537 = vmul.f32 %v1534, %v273
          %1541 = vrot.lane.b32.xlu0 %v1535, 96
          %v1542 = vpop.permute.xlu0 %1541
          %1543 = vrot.lane.b32.xlu0 %v1536, 96
          %v1544 = vpop.permute.xlu0 %1543
          %1545 = vrot.lane.b32.xlu0 %v1537, 96
          %v1546 = vpop.permute.xlu0 %1545
          %v1547 = vsel %vm369, %v1542, %v1544
          %v1548 = vsel %vm369, %v1544, %v1546
          %v1552 = vadd.f32 %v1531, %v1547
          %v1553 = vadd.f32 %v1532, %v1548
          %v1554 = vadd.f32 %v1533, %v1546
          %s1555 = sld [smem:[#allocation5 + $0x19]]
          %s1556 = sld [smem:[#allocation5 + $0x4a]]
          %v1557 = vstv %s1555
          %v1558 = vmul.f32 %v1557, %v260
          %v1559 = vmul.f32 %v1557, %v256
          %v1560 = vmul.f32 %v1557, %v261
          %1564 = vrot.lane.b32.xlu0 %v1558, 80
          %v1565 = vpop.permute.xlu0 %1564
          %1566 = vrot.lane.b32.xlu0 %v1559, 80
          %v1567 = vpop.permute.xlu0 %1566
          %1568 = vrot.lane.b32.xlu0 %v1560, 80
          %v1569 = vpop.permute.xlu0 %1568
          %v1570 = vsel %vm410, %v1565, %v1567
          %v1571 = vsel %vm410, %v1567, %v1569
          %v1575 = vadd.f32 %v1552, %v1570
          %v1576 = vadd.f32 %v1553, %v1571
          %v1577 = vadd.f32 %v1554, %v1569
          %v1578 = vstv %s1556
          %v1579 = vmul.f32 %v1578, %v272
          %v1580 = vmul.f32 %v1578, %v268
          %v1581 = vmul.f32 %v1578, %v273
          %1585 = vrot.lane.b32.xlu0 %v1579, 80
          %v1586 = vpop.permute.xlu0 %1585
          %1587 = vrot.lane.b32.xlu0 %v1580, 80
          %v1588 = vpop.permute.xlu0 %1587
          %1589 = vrot.lane.b32.xlu0 %v1581, 80
          %v1590 = vpop.permute.xlu0 %1589
          %v1591 = vsel %vm410, %v1586, %v1588
          %v1592 = vsel %vm410, %v1588, %v1590
          %v1596 = vadd.f32 %v1575, %v1591
          %v1597 = vadd.f32 %v1576, %v1592
          %v1598 = vadd.f32 %v1577, %v1590
          %s1599 = sld [smem:[#allocation5 + $0x20]]
          %s1600 = sld [smem:[#allocation5 + $0x51]]
          %v1601 = vstv %s1599
          %v1602 = vmul.f32 %v1601, %v260
          %v1603 = vmul.f32 %v1601, %v256
          %v1604 = vmul.f32 %v1601, %v261
          %1608 = vrot.lane.b32.xlu0 %v1602, 64
          %v1609 = vpop.permute.xlu0 %1608
          %1610 = vrot.lane.b32.xlu0 %v1603, 64
          %v1611 = vpop.permute.xlu0 %1610
          %1612 = vrot.lane.b32.xlu0 %v1604, 64
          %v1613 = vpop.permute.xlu0 %1612
          %v1614 = vsel %vm451, %v1609, %v1611
          %v1615 = vsel %vm451, %v1611, %v1613
          %v1619 = vadd.f32 %v1596, %v1614
          %v1620 = vadd.f32 %v1597, %v1615
          %v1621 = vadd.f32 %v1598, %v1613
          %v1622 = vstv %s1600
          %v1623 = vmul.f32 %v1622, %v272
          %v1624 = vmul.f32 %v1622, %v268
          %v1625 = vmul.f32 %v1622, %v273
          %1629 = vrot.lane.b32.xlu0 %v1623, 64
          %v1630 = vpop.permute.xlu0 %1629
          %1631 = vrot.lane.b32.xlu0 %v1624, 64
          %v1632 = vpop.permute.xlu0 %1631
          %1633 = vrot.lane.b32.xlu0 %v1625, 64
          %v1634 = vpop.permute.xlu0 %1633
          %v1635 = vsel %vm451, %v1630, %v1632
          %v1636 = vsel %vm451, %v1632, %v1634
          %v1640 = vadd.f32 %v1619, %v1635
          %v1641 = vadd.f32 %v1620, %v1636
          %v1642 = vadd.f32 %v1621, %v1634
          %s1643 = sld [smem:[#allocation5 + $0x27]]
          %s1644 = sld [smem:[#allocation5 + $0x58]]
          %v1645 = vstv %s1643
          %v1646 = vmul.f32 %v1645, %v260
          %v1647 = vmul.f32 %v1645, %v256
          %v1648 = vmul.f32 %v1645, %v261
          %1652 = vrot.lane.b32.xlu0 %v1646, 48
          %v1653 = vpop.permute.xlu0 %1652
          %1654 = vrot.lane.b32.xlu0 %v1647, 48
          %v1655 = vpop.permute.xlu0 %1654
          %1656 = vrot.lane.b32.xlu0 %v1648, 48
          %v1657 = vpop.permute.xlu0 %1656
          %v1658 = vsel %vm492, %v1653, %v1655
          %v1659 = vsel %vm492, %v1655, %v1657
          %v1663 = vadd.f32 %v1640, %v1658
          %v1664 = vadd.f32 %v1641, %v1659
          %v1665 = vadd.f32 %v1642, %v1657
          %v1666 = vstv %s1644
          %v1667 = vmul.f32 %v1666, %v272
          %v1668 = vmul.f32 %v1666, %v268
          %v1669 = vmul.f32 %v1666, %v273
          %1673 = vrot.lane.b32.xlu0 %v1667, 48
          %v1674 = vpop.permute.xlu0 %1673
          %1675 = vrot.lane.b32.xlu0 %v1668, 48
          %v1676 = vpop.permute.xlu0 %1675
          %1677 = vrot.lane.b32.xlu0 %v1669, 48
          %v1678 = vpop.permute.xlu0 %1677
          %v1679 = vsel %vm492, %v1674, %v1676
          %v1680 = vsel %vm492, %v1676, %v1678
          %v1684 = vadd.f32 %v1663, %v1679
          %v1685 = vadd.f32 %v1664, %v1680
          %v1686 = vadd.f32 %v1665, %v1678
          %s1687 = sld [smem:[#allocation5 + $0x2e]]
          %s1688 = sld [smem:[#allocation5 + $0x5f]]
          %v1689 = vstv %s1687
          %v1690 = vmul.f32 %v1689, %v260
          %v1691 = vmul.f32 %v1689, %v256
          %v1692 = vmul.f32 %v1689, %v261
          %1696 = vrot.lane.b32.xlu0 %v1690, 32
          %v1697 = vpop.permute.xlu0 %1696
          %1698 = vrot.lane.b32.xlu0 %v1691, 32
          %v1699 = vpop.permute.xlu0 %1698
          %1700 = vrot.lane.b32.xlu0 %v1692, 32
          %v1701 = vpop.permute.xlu0 %1700
          %v1702 = vsel %vm533, %v1697, %v1699
          %v1703 = vsel %vm533, %v1699, %v1701
          %v1707 = vadd.f32 %v1684, %v1702
          %v1708 = vadd.f32 %v1685, %v1703
          %v1709 = vadd.f32 %v1686, %v1701
          %v1710 = vstv %s1688
          %v1711 = vmul.f32 %v1710, %v272
          %v1712 = vmul.f32 %v1710, %v268
          %v1713 = vmul.f32 %v1710, %v273
          %1717 = vrot.lane.b32.xlu0 %v1711, 32
          %v1718 = vpop.permute.xlu0 %1717
          %1719 = vrot.lane.b32.xlu0 %v1712, 32
          %v1720 = vpop.permute.xlu0 %1719
          %1721 = vrot.lane.b32.xlu0 %v1713, 32
          %v1722 = vpop.permute.xlu0 %1721
          %v1723 = vsel %vm533, %v1718, %v1720
          %v1724 = vsel %vm533, %v1720, %v1722
          %v1728 = vadd.f32 %v1707, %v1723
          %v1729 = vadd.f32 %v1708, %v1724
          %v1730 = vadd.f32 %v1709, %v1722
          %vm1731 = vcmp.ge.s32.totalorder %v299, 4294967295
          %vm1732 = vcmp.ge.s32.totalorder %v300, 4294967295
          %vm1733 = vcmp.lt.s32.totalorder %v299, 15
          %vm1734 = vcmp.lt.s32.totalorder %v300, 15
          %vm1735 = vmand %vm1731, %vm1733
          %vm1736 = vmand %vm1732, %vm1734
          %1740 = vrot.lane.b32.xlu0 %v1728, 124
          %v1741 = vpop.permute.xlu0 %1740
          %1742 = vrot.lane.b32.xlu0 %v1729, 124
          %v1743 = vpop.permute.xlu0 %1742
          %1744 = vrot.lane.b32.xlu0 %v1730, 124
          %v1745 = vpop.permute.xlu0 %1744
          %vm1746 = vcmask 1014784
          %v1747 = vsel %vm1746, %v1741, %v1743
          %v1748 = vsel %vm1746, %v1743, %v1745
          %v1751 = vsel %vm1735, %v1747, 0.0
          %v1752 = vsel %vm1736, %v1748, 0.0
          %s1753 = sld [smem:[#allocation5 + $0x5]]
          %s1754 = sld [smem:[#allocation5 + $0x36]]
          %v1755 = vstv %s1753
          %v1756 = vmul.f32 %v1755, %v260
          %v1757 = vmul.f32 %v1755, %v256
          %v1758 = vmul.f32 %v1755, %v261
          %v1759 = vadd.f32 %v1756, 0.0
          %v1760 = vadd.f32 %v1757, 0.0
          %v1761 = vadd.f32 %v1758, 0.0
          %v1762 = vstv %s1754
          %v1763 = vmul.f32 %v1762, %v272
          %v1764 = vmul.f32 %v1762, %v268
          %v1765 = vmul.f32 %v1762, %v273
          %v1766 = vadd.f32 %v1759, %v1763
          %v1767 = vadd.f32 %v1760, %v1764
          %v1768 = vadd.f32 %v1761, %v1765
          %s1769 = sld [smem:[#allocation5 + $0xc]]
          %s1770 = sld [smem:[#allocation5 + $0x3d]]
          %v1771 = vstv %s1769
          %v1772 = vmul.f32 %v1771, %v260
          %v1773 = vmul.f32 %v1771, %v256
          %v1774 = vmul.f32 %v1771, %v261
          %1778 = vrot.lane.b32.xlu0 %v1772, 112
          %v1779 = vpop.permute.xlu0 %1778
          %1780 = vrot.lane.b32.xlu0 %v1773, 112
          %v1781 = vpop.permute.xlu0 %1780
          %1782 = vrot.lane.b32.xlu0 %v1774, 112
          %v1783 = vpop.permute.xlu0 %1782
          %v1784 = vsel %vm328, %v1779, %v1781
          %v1785 = vsel %vm328, %v1781, %v1783
          %v1789 = vadd.f32 %v1766, %v1784
          %v1790 = vadd.f32 %v1767, %v1785
          %v1791 = vadd.f32 %v1768, %v1783
          %v1792 = vstv %s1770
          %v1793 = vmul.f32 %v1792, %v272
          %v1794 = vmul.f32 %v1792, %v268
          %v1795 = vmul.f32 %v1792, %v273
          %1799 = vrot.lane.b32.xlu0 %v1793, 112
          %v1800 = vpop.permute.xlu0 %1799
          %1801 = vrot.lane.b32.xlu0 %v1794, 112
          %v1802 = vpop.permute.xlu0 %1801
          %1803 = vrot.lane.b32.xlu0 %v1795, 112
          %v1804 = vpop.permute.xlu0 %1803
          %v1805 = vsel %vm328, %v1800, %v1802
          %v1806 = vsel %vm328, %v1802, %v1804
          %v1810 = vadd.f32 %v1789, %v1805
          %v1811 = vadd.f32 %v1790, %v1806
          %v1812 = vadd.f32 %v1791, %v1804
          %s1813 = sld [smem:[#allocation5 + $0x13]]
          %s1814 = sld [smem:[#allocation5 + $0x44]]
          %v1815 = vstv %s1813
          %v1816 = vmul.f32 %v1815, %v260
          %v1817 = vmul.f32 %v1815, %v256
          %v1818 = vmul.f32 %v1815, %v261
          %1822 = vrot.lane.b32.xlu0 %v1816, 96
          %v1823 = vpop.permute.xlu0 %1822
          %1824 = vrot.lane.b32.xlu0 %v1817, 96
          %v1825 = vpop.permute.xlu0 %1824
          %1826 = vrot.lane.b32.xlu0 %v1818, 96
          %v1827 = vpop.permute.xlu0 %1826
          %v1828 = vsel %vm369, %v1823, %v1825
          %v1829 = vsel %vm369, %v1825, %v1827
          %v1833 = vadd.f32 %v1810, %v1828
          %v1834 = vadd.f32 %v1811, %v1829
          %v1835 = vadd.f32 %v1812, %v1827
          %v1836 = vstv %s1814
          %v1837 = vmul.f32 %v1836, %v272
          %v1838 = vmul.f32 %v1836, %v268
          %v1839 = vmul.f32 %v1836, %v273
          %1843 = vrot.lane.b32.xlu0 %v1837, 96
          %v1844 = vpop.permute.xlu0 %1843
          %1845 = vrot.lane.b32.xlu0 %v1838, 96
          %v1846 = vpop.permute.xlu0 %1845
          %1847 = vrot.lane.b32.xlu0 %v1839, 96
          %v1848 = vpop.permute.xlu0 %1847
          %v1849 = vsel %vm369, %v1844, %v1846
          %v1850 = vsel %vm369, %v1846, %v1848
          %v1854 = vadd.f32 %v1833, %v1849
          %v1855 = vadd.f32 %v1834, %v1850
          %v1856 = vadd.f32 %v1835, %v1848
          %s1857 = sld [smem:[#allocation5 + $0x1a]]
          %s1858 = sld [smem:[#allocation5 + $0x4b]]
          %v1859 = vstv %s1857
          %v1860 = vmul.f32 %v1859, %v260
          %v1861 = vmul.f32 %v1859, %v256
          %v1862 = vmul.f32 %v1859, %v261
          %1866 = vrot.lane.b32.xlu0 %v1860, 80
          %v1867 = vpop.permute.xlu0 %1866
          %1868 = vrot.lane.b32.xlu0 %v1861, 80
          %v1869 = vpop.permute.xlu0 %1868
          %1870 = vrot.lane.b32.xlu0 %v1862, 80
          %v1871 = vpop.permute.xlu0 %1870
          %v1872 = vsel %vm410, %v1867, %v1869
          %v1873 = vsel %vm410, %v1869, %v1871
          %v1877 = vadd.f32 %v1854, %v1872
          %v1878 = vadd.f32 %v1855, %v1873
          %v1879 = vadd.f32 %v1856, %v1871
          %v1880 = vstv %s1858
          %v1881 = vmul.f32 %v1880, %v272
          %v1882 = vmul.f32 %v1880, %v268
          %v1883 = vmul.f32 %v1880, %v273
          %1887 = vrot.lane.b32.xlu0 %v1881, 80
          %v1888 = vpop.permute.xlu0 %1887
          %1889 = vrot.lane.b32.xlu0 %v1882, 80
          %v1890 = vpop.permute.xlu0 %1889
          %1891 = vrot.lane.b32.xlu0 %v1883, 80
          %v1892 = vpop.permute.xlu0 %1891
          %v1893 = vsel %vm410, %v1888, %v1890
          %v1894 = vsel %vm410, %v1890, %v1892
          %v1898 = vadd.f32 %v1877, %v1893
          %v1899 = vadd.f32 %v1878, %v1894
          %v1900 = vadd.f32 %v1879, %v1892
          %s1901 = sld [smem:[#allocation5 + $0x21]]
          %s1902 = sld [smem:[#allocation5 + $0x52]]
          %v1903 = vstv %s1901
          %v1904 = vmul.f32 %v1903, %v260
          %v1905 = vmul.f32 %v1903, %v256
          %v1906 = vmul.f32 %v1903, %v261
          %1910 = vrot.lane.b32.xlu0 %v1904, 64
          %v1911 = vpop.permute.xlu0 %1910
          %1912 = vrot.lane.b32.xlu0 %v1905, 64
          %v1913 = vpop.permute.xlu0 %1912
          %1914 = vrot.lane.b32.xlu0 %v1906, 64
          %v1915 = vpop.permute.xlu0 %1914
          %v1916 = vsel %vm451, %v1911, %v1913
          %v1917 = vsel %vm451, %v1913, %v1915
          %v1921 = vadd.f32 %v1898, %v1916
          %v1922 = vadd.f32 %v1899, %v1917
          %v1923 = vadd.f32 %v1900, %v1915
          %v1924 = vstv %s1902
          %v1925 = vmul.f32 %v1924, %v272
          %v1926 = vmul.f32 %v1924, %v268
          %v1927 = vmul.f32 %v1924, %v273
          %1931 = vrot.lane.b32.xlu0 %v1925, 64
          %v1932 = vpop.permute.xlu0 %1931
          %1933 = vrot.lane.b32.xlu0 %v1926, 64
          %v1934 = vpop.permute.xlu0 %1933
          %1935 = vrot.lane.b32.xlu0 %v1927, 64
          %v1936 = vpop.permute.xlu0 %1935
          %v1937 = vsel %vm451, %v1932, %v1934
          %v1938 = vsel %vm451, %v1934, %v1936
          %v1942 = vadd.f32 %v1921, %v1937
          %v1943 = vadd.f32 %v1922, %v1938
          %v1944 = vadd.f32 %v1923, %v1936
          %s1945 = sld [smem:[#allocation5 + $0x28]]
          %s1946 = sld [smem:[#allocation5 + $0x59]]
          %v1947 = vstv %s1945
          %v1948 = vmul.f32 %v1947, %v260
          %v1949 = vmul.f32 %v1947, %v256
          %v1950 = vmul.f32 %v1947, %v261
          %1954 = vrot.lane.b32.xlu0 %v1948, 48
          %v1955 = vpop.permute.xlu0 %1954
          %1956 = vrot.lane.b32.xlu0 %v1949, 48
          %v1957 = vpop.permute.xlu0 %1956
          %1958 = vrot.lane.b32.xlu0 %v1950, 48
          %v1959 = vpop.permute.xlu0 %1958
          %v1960 = vsel %vm492, %v1955, %v1957
          %v1961 = vsel %vm492, %v1957, %v1959
          %v1965 = vadd.f32 %v1942, %v1960
          %v1966 = vadd.f32 %v1943, %v1961
          %v1967 = vadd.f32 %v1944, %v1959
          %v1968 = vstv %s1946
          %v1969 = vmul.f32 %v1968, %v272
          %v1970 = vmul.f32 %v1968, %v268
          %v1971 = vmul.f32 %v1968, %v273
          %1975 = vrot.lane.b32.xlu0 %v1969, 48
          %v1976 = vpop.permute.xlu0 %1975
          %1977 = vrot.lane.b32.xlu0 %v1970, 48
          %v1978 = vpop.permute.xlu0 %1977
          %1979 = vrot.lane.b32.xlu0 %v1971, 48
          %v1980 = vpop.permute.xlu0 %1979
          %v1981 = vsel %vm492, %v1976, %v1978
          %v1982 = vsel %vm492, %v1978, %v1980
          %v1986 = vadd.f32 %v1965, %v1981
          %v1987 = vadd.f32 %v1966, %v1982
          %v1988 = vadd.f32 %v1967, %v1980
          %s1989 = sld [smem:[#allocation5 + $0x2f]]
          %s1990 = sld [smem:[#allocation5 + $0x60]]
          %v1991 = vstv %s1989
          %v1992 = vmul.f32 %v1991, %v260
          %v1993 = vmul.f32 %v1991, %v256
          %v1994 = vmul.f32 %v1991, %v261
          %1998 = vrot.lane.b32.xlu0 %v1992, 32
          %v1999 = vpop.permute.xlu0 %1998
          %2000 = vrot.lane.b32.xlu0 %v1993, 32
          %v2001 = vpop.permute.xlu0 %2000
          %2002 = vrot.lane.b32.xlu0 %v1994, 32
          %v2003 = vpop.permute.xlu0 %2002
          %v2004 = vsel %vm533, %v1999, %v2001
          %v2005 = vsel %vm533, %v2001, %v2003
          %v2009 = vadd.f32 %v1986, %v2004
          %v2010 = vadd.f32 %v1987, %v2005
          %v2011 = vadd.f32 %v1988, %v2003
          %v2012 = vstv %s1990
          %v2013 = vmul.f32 %v2012, %v272
          %v2014 = vmul.f32 %v2012, %v268
          %v2015 = vmul.f32 %v2012, %v273
          %2019 = vrot.lane.b32.xlu0 %v2013, 32
          %v2020 = vpop.permute.xlu0 %2019
          %2021 = vrot.lane.b32.xlu0 %v2014, 32
          %v2022 = vpop.permute.xlu0 %2021
          %2023 = vrot.lane.b32.xlu0 %v2015, 32
          %v2024 = vpop.permute.xlu0 %2023
          %v2025 = vsel %vm533, %v2020, %v2022
          %v2026 = vsel %vm533, %v2022, %v2024
          %v2030 = vadd.f32 %v2009, %v2025
          %v2031 = vadd.f32 %v2010, %v2026
          %v2032 = vadd.f32 %v2011, %v2024
          %vm2033 = vcmp.ge.s32.totalorder %v299, 4294967294
          %vm2034 = vcmp.ge.s32.totalorder %v300, 4294967294
          %vm2035 = vcmp.lt.s32.totalorder %v299, 14
          %vm2036 = vcmp.lt.s32.totalorder %v300, 14
          %vm2037 = vmand %vm2033, %vm2035
          %vm2038 = vmand %vm2034, %vm2036
          %2042 = vrot.lane.b32.xlu0 %v2030, 123
          %v2043 = vpop.permute.xlu0 %2042
          %2044 = vrot.lane.b32.xlu0 %v2031, 123
          %v2045 = vpop.permute.xlu0 %2044
          %2046 = vrot.lane.b32.xlu0 %v2032, 123
          %v2047 = vpop.permute.xlu0 %2046
          %vm2048 = vcmask 1006592
          %v2049 = vsel %vm2048, %v2043, %v2045
          %v2050 = vsel %vm2048, %v2045, %v2047
          %v2053 = vsel %vm2037, %v2049, 0.0
          %v2054 = vsel %vm2038, %v2050, 0.0
          %s2055 = sld [smem:[#allocation5 + $0x6]]
          %s2056 = sld [smem:[#allocation5 + $0x37]]
          %v2057 = vstv %s2055
          %v2058 = vmul.f32 %v2057, %v260
          %v2059 = vmul.f32 %v2057, %v256
          %v2060 = vmul.f32 %v2057, %v261
          %v2061 = vadd.f32 %v2058, 0.0
          %v2062 = vadd.f32 %v2059, 0.0
          %v2063 = vadd.f32 %v2060, 0.0
          %v2064 = vstv %s2056
          %v2065 = vmul.f32 %v2064, %v272
          %v2066 = vmul.f32 %v2064, %v268
          %v2067 = vmul.f32 %v2064, %v273
          %v2068 = vadd.f32 %v2061, %v2065
          %v2069 = vadd.f32 %v2062, %v2066
          %v2070 = vadd.f32 %v2063, %v2067
          %s2071 = sld [smem:[#allocation5 + $0xd]]
          %s2072 = sld [smem:[#allocation5 + $0x3e]]
          %v2073 = vstv %s2071
          %v2074 = vmul.f32 %v2073, %v260
          %v2075 = vmul.f32 %v2073, %v256
          %v2076 = vmul.f32 %v2073, %v261
          %2080 = vrot.lane.b32.xlu0 %v2074, 112
          %v2081 = vpop.permute.xlu0 %2080
          %2082 = vrot.lane.b32.xlu0 %v2075, 112
          %v2083 = vpop.permute.xlu0 %2082
          %2084 = vrot.lane.b32.xlu0 %v2076, 112
          %v2085 = vpop.permute.xlu0 %2084
          %v2086 = vsel %vm328, %v2081, %v2083
          %v2087 = vsel %vm328, %v2083, %v2085
          %v2091 = vadd.f32 %v2068, %v2086
          %v2092 = vadd.f32 %v2069, %v2087
          %v2093 = vadd.f32 %v2070, %v2085
          %v2094 = vstv %s2072
          %v2095 = vmul.f32 %v2094, %v272
          %v2096 = vmul.f32 %v2094, %v268
          %v2097 = vmul.f32 %v2094, %v273
          %2101 = vrot.lane.b32.xlu0 %v2095, 112
          %v2102 = vpop.permute.xlu0 %2101
          %2103 = vrot.lane.b32.xlu0 %v2096, 112
          %v2104 = vpop.permute.xlu0 %2103
          %2105 = vrot.lane.b32.xlu0 %v2097, 112
          %v2106 = vpop.permute.xlu0 %2105
          %v2107 = vsel %vm328, %v2102, %v2104
          %v2108 = vsel %vm328, %v2104, %v2106
          %v2112 = vadd.f32 %v2091, %v2107
          %v2113 = vadd.f32 %v2092, %v2108
          %v2114 = vadd.f32 %v2093, %v2106
          %s2115 = sld [smem:[#allocation5 + $0x14]]
          %s2116 = sld [smem:[#allocation5 + $0x45]]
          %v2117 = vstv %s2115
          %v2118 = vmul.f32 %v2117, %v260
          %v2119 = vmul.f32 %v2117, %v256
          %v2120 = vmul.f32 %v2117, %v261
          %2124 = vrot.lane.b32.xlu0 %v2118, 96
          %v2125 = vpop.permute.xlu0 %2124
          %2126 = vrot.lane.b32.xlu0 %v2119, 96
          %v2127 = vpop.permute.xlu0 %2126
          %2128 = vrot.lane.b32.xlu0 %v2120, 96
          %v2129 = vpop.permute.xlu0 %2128
          %v2130 = vsel %vm369, %v2125, %v2127
          %v2131 = vsel %vm369, %v2127, %v2129
          %v2135 = vadd.f32 %v2112, %v2130
          %v2136 = vadd.f32 %v2113, %v2131
          %v2137 = vadd.f32 %v2114, %v2129
          %v2138 = vstv %s2116
          %v2139 = vmul.f32 %v2138, %v272
          %v2140 = vmul.f32 %v2138, %v268
          %v2141 = vmul.f32 %v2138, %v273
          %2145 = vrot.lane.b32.xlu0 %v2139, 96
          %v2146 = vpop.permute.xlu0 %2145
          %2147 = vrot.lane.b32.xlu0 %v2140, 96
          %v2148 = vpop.permute.xlu0 %2147
          %2149 = vrot.lane.b32.xlu0 %v2141, 96
          %v2150 = vpop.permute.xlu0 %2149
          %v2151 = vsel %vm369, %v2146, %v2148
          %v2152 = vsel %vm369, %v2148, %v2150
          %v2156 = vadd.f32 %v2135, %v2151
          %v2157 = vadd.f32 %v2136, %v2152
          %v2158 = vadd.f32 %v2137, %v2150
          %s2159 = sld [smem:[#allocation5 + $0x1b]]
          %s2160 = sld [smem:[#allocation5 + $0x4c]]
          %v2161 = vstv %s2159
          %v2162 = vmul.f32 %v2161, %v260
          %v2163 = vmul.f32 %v2161, %v256
          %v2164 = vmul.f32 %v2161, %v261
          %2168 = vrot.lane.b32.xlu0 %v2162, 80
          %v2169 = vpop.permute.xlu0 %2168
          %2170 = vrot.lane.b32.xlu0 %v2163, 80
          %v2171 = vpop.permute.xlu0 %2170
          %2172 = vrot.lane.b32.xlu0 %v2164, 80
          %v2173 = vpop.permute.xlu0 %2172
          %v2174 = vsel %vm410, %v2169, %v2171
          %v2175 = vsel %vm410, %v2171, %v2173
          %v2179 = vadd.f32 %v2156, %v2174
          %v2180 = vadd.f32 %v2157, %v2175
          %v2181 = vadd.f32 %v2158, %v2173
          %v2182 = vstv %s2160
          %v2183 = vmul.f32 %v2182, %v272
          %v2184 = vmul.f32 %v2182, %v268
          %v2185 = vmul.f32 %v2182, %v273
          %2189 = vrot.lane.b32.xlu0 %v2183, 80
          %v2190 = vpop.permute.xlu0 %2189
          %2191 = vrot.lane.b32.xlu0 %v2184, 80
          %v2192 = vpop.permute.xlu0 %2191
          %2193 = vrot.lane.b32.xlu0 %v2185, 80
          %v2194 = vpop.permute.xlu0 %2193
          %v2195 = vsel %vm410, %v2190, %v2192
          %v2196 = vsel %vm410, %v2192, %v2194
          %v2200 = vadd.f32 %v2179, %v2195
          %v2201 = vadd.f32 %v2180, %v2196
          %v2202 = vadd.f32 %v2181, %v2194
          %s2203 = sld [smem:[#allocation5 + $0x22]]
          %s2204 = sld [smem:[#allocation5 + $0x53]]
          %v2205 = vstv %s2203
          %v2206 = vmul.f32 %v2205, %v260
          %v2207 = vmul.f32 %v2205, %v256
          %v2208 = vmul.f32 %v2205, %v261
          %2212 = vrot.lane.b32.xlu0 %v2206, 64
          %v2213 = vpop.permute.xlu0 %2212
          %2214 = vrot.lane.b32.xlu0 %v2207, 64
          %v2215 = vpop.permute.xlu0 %2214
          %2216 = vrot.lane.b32.xlu0 %v2208, 64
          %v2217 = vpop.permute.xlu0 %2216
          %v2218 = vsel %vm451, %v2213, %v2215
          %v2219 = vsel %vm451, %v2215, %v2217
          %v2223 = vadd.f32 %v2200, %v2218
          %v2224 = vadd.f32 %v2201, %v2219
          %v2225 = vadd.f32 %v2202, %v2217
          %v2226 = vstv %s2204
          %v2227 = vmul.f32 %v2226, %v272
          %v2228 = vmul.f32 %v2226, %v268
          %v2229 = vmul.f32 %v2226, %v273
          %2233 = vrot.lane.b32.xlu0 %v2227, 64
          %v2234 = vpop.permute.xlu0 %2233
          %2235 = vrot.lane.b32.xlu0 %v2228, 64
          %v2236 = vpop.permute.xlu0 %2235
          %2237 = vrot.lane.b32.xlu0 %v2229, 64
          %v2238 = vpop.permute.xlu0 %2237
          %v2239 = vsel %vm451, %v2234, %v2236
          %v2240 = vsel %vm451, %v2236, %v2238
          %v2244 = vadd.f32 %v2223, %v2239
          %v2245 = vadd.f32 %v2224, %v2240
          %v2246 = vadd.f32 %v2225, %v2238
          %s2247 = sld [smem:[#allocation5 + $0x29]]
          %s2248 = sld [smem:[#allocation5 + $0x5a]]
          %v2249 = vstv %s2247
          %v2250 = vmul.f32 %v2249, %v260
          %v2251 = vmul.f32 %v2249, %v256
          %v2252 = vmul.f32 %v2249, %v261
          %2256 = vrot.lane.b32.xlu0 %v2250, 48
          %v2257 = vpop.permute.xlu0 %2256
          %2258 = vrot.lane.b32.xlu0 %v2251, 48
          %v2259 = vpop.permute.xlu0 %2258
          %2260 = vrot.lane.b32.xlu0 %v2252, 48
          %v2261 = vpop.permute.xlu0 %2260
          %v2262 = vsel %vm492, %v2257, %v2259
          %v2263 = vsel %vm492, %v2259, %v2261
          %v2267 = vadd.f32 %v2244, %v2262
          %v2268 = vadd.f32 %v2245, %v2263
          %v2269 = vadd.f32 %v2246, %v2261
          %v2270 = vstv %s2248
          %v2271 = vmul.f32 %v2270, %v272
          %v2272 = vmul.f32 %v2270, %v268
          %v2273 = vmul.f32 %v2270, %v273
          %2277 = vrot.lane.b32.xlu0 %v2271, 48
          %v2278 = vpop.permute.xlu0 %2277
          %2279 = vrot.lane.b32.xlu0 %v2272, 48
          %v2280 = vpop.permute.xlu0 %2279
          %2281 = vrot.lane.b32.xlu0 %v2273, 48
          %v2282 = vpop.permute.xlu0 %2281
          %v2283 = vsel %vm492, %v2278, %v2280
          %v2284 = vsel %vm492, %v2280, %v2282
          %v2288 = vadd.f32 %v2267, %v2283
          %v2289 = vadd.f32 %v2268, %v2284
          %v2290 = vadd.f32 %v2269, %v2282
          %s2291 = sld [smem:[#allocation5 + $0x30]]
          %s2292 = sld [smem:[#allocation5 + $0x61]]
          %v2293 = vstv %s2291
          %v2294 = vmul.f32 %v2293, %v260
          %v2295 = vmul.f32 %v2293, %v256
          %v2296 = vmul.f32 %v2293, %v261
          %2300 = vrot.lane.b32.xlu0 %v2294, 32
          %v2301 = vpop.permute.xlu0 %2300
          %2302 = vrot.lane.b32.xlu0 %v2295, 32
          %v2303 = vpop.permute.xlu0 %2302
          %2304 = vrot.lane.b32.xlu0 %v2296, 32
          %v2305 = vpop.permute.xlu0 %2304
          %v2306 = vsel %vm533, %v2301, %v2303
          %v2307 = vsel %vm533, %v2303, %v2305
          %v2311 = vadd.f32 %v2288, %v2306
          %v2312 = vadd.f32 %v2289, %v2307
          %v2313 = vadd.f32 %v2290, %v2305
          %v2314 = vstv %s2292
          %v2315 = vmul.f32 %v2314, %v272
          %v2316 = vmul.f32 %v2314, %v268
          %v2317 = vmul.f32 %v2314, %v273
          %2321 = vrot.lane.b32.xlu0 %v2315, 32
          %v2322 = vpop.permute.xlu0 %2321
          %2323 = vrot.lane.b32.xlu0 %v2316, 32
          %v2324 = vpop.permute.xlu0 %2323
          %2325 = vrot.lane.b32.xlu0 %v2317, 32
          %v2326 = vpop.permute.xlu0 %2325
          %v2327 = vsel %vm533, %v2322, %v2324
          %v2328 = vsel %vm533, %v2324, %v2326
          %v2332 = vadd.f32 %v2311, %v2327
          %v2333 = vadd.f32 %v2312, %v2328
          %v2334 = vadd.f32 %v2313, %v2326
          %vm2335 = vcmp.ge.s32.totalorder %v299, 4294967293
          %vm2336 = vcmp.ge.s32.totalorder %v300, 4294967293
          %vm2337 = vcmp.lt.s32.totalorder %v299, 13
          %vm2338 = vcmp.lt.s32.totalorder %v300, 13
          %vm2339 = vmand %vm2335, %vm2337
          %vm2340 = vmand %vm2336, %vm2338
          %2344 = vrot.lane.b32.xlu0 %v2332, 122
          %v2345 = vpop.permute.xlu0 %2344
          %2346 = vrot.lane.b32.xlu0 %v2333, 122
          %v2347 = vpop.permute.xlu0 %2346
          %2348 = vrot.lane.b32.xlu0 %v2334, 122
          %v2349 = vpop.permute.xlu0 %2348
          %vm2350 = vcmask 998400
          %v2351 = vsel %vm2350, %v2345, %v2347
          %v2352 = vsel %vm2350, %v2347, %v2349
          %v2355 = vsel %vm2339, %v2351, 0.0
          %v2356 = vsel %vm2340, %v2352, 0.0
          %v2357 = vadd.f32 %v565, %v867
          %v2358 = vadd.f32 %v566, %v868
          %2362 = vrot.lane.b32.xlu0 %v1448, 125
          %v2363 = vpop.permute.xlu0 %2362
          %2364 = vrot.lane.b32.xlu0 %v1449, 125
          %v2365 = vpop.permute.xlu0 %2364
          %2366 = vrot.lane.b32.xlu0 %v1450, 125
          %v2367 = vpop.permute.xlu0 %2366
          %vm2368 = vcmask 1022976
          %v2369 = vsel %vm2368, %v2363, %v2365
          %v2370 = vsel %vm2368, %v2365, %v2367
          %v2373 = vadd.f32 %v1169, %v2369
          %v2374 = vadd.f32 %v1170, %v2370
          %v2375 = vadd.f32 %v1751, %v2053
          %v2376 = vadd.f32 %v1752, %v2054
          %v2377 = vadd.f32 %v2357, %v2373
          %v2378 = vadd.f32 %v2358, %v2374
          %v2379 = vadd.f32 %v2375, %v2355
          %v2380 = vadd.f32 %v2376, %v2356
          %v2381 = vadd.f32 %v2377, %v2379
          %v2382 = vadd.f32 %v2378, %v2380
          %v2383 = vxor.u32 %v2381, 2147483648
          %v2384 = vxor.u32 %v2382, 2147483648
          %v2385 = vmul.f32 %v2383, 1.442695
          %v2386 = vpow.pop %v2385
          %v2387 = vmul.f32 %v2384, 1.442695
          %v2388 = vpow.pop %v2387
          %v2389 = vadd.f32 %v2386, 1.0
          %v2390 = vadd.f32 %v2388, 1.0
          %v2391 = vrcp.pop %v2389
          %v2392 = vmul.f32 1.0, %v2391
          %v2393 = vrcp.pop %v2390
          %v2394 = vmul.f32 1.0, %v2393
          %v2397 = vcombine.low %v2392, %v2394
          %v2399 = vunpack.c.l.s4 1966171168
          %v2400 = vunpack.c.0.s8 %v2399
          %v2401 = vlaneseq
          %v2402 = vshrl.u32 %v2401, 7
          %v2403 = vsub.s32 %v2400, %v2402
          %v2404 = vrot.slane %v2397, %v2403
          %v2406 = vunpack.c.l.s4 1966171168
          %v2407 = vunpack.c.0.s8 %v2406
          %v2408 = vlaneseq
          %v2409 = vshrl.u32 %v2408, 7
          %v2410 = vsub.s32 %v2407, %v2409
          %v2411 = vrot.slane %v2404, %v2410
          %v2413 = vlaneseq
          %vm2414 = vcmp.ge.s32.totalorder %v2413, 0
          %vm2415 = vcmp.lt.s32.totalorder %v2413, 256
          %vm2416 = vmand %vm2414, %vm2415
          %2417 = vst.msk [vmem:[%s153] sm:$0x3] %vm2416, %v2411
        $region40: #{tpu_custom_call.1} parent=23 // pred_fallthru
          _
        %s2418 = sand.u32 %s71, 1
        %s2419 = scalar_lea.sflag [#allocation8], %s2418
        %s2420 = sand.u32 %s71, 1
        %s2421 = smul.addr %s2420, 2
        %s2422 = scalar_lea.vmem [#allocation9], %s2421
        // Predicated region
        $region41: #{tpu_custom_call.1} parent=23 // pred_check
          %p2423 = pneg %p81
        $region42: #{tpu_custom_call.1} parent=23 // pred_check_branch
          %2425 = sbr.rel (%p2423) target = $region44
        $region43: #{tpu_custom_call.1} parent=23 // pred_region
          %s2427 = ssub.s32 32, 32
          %2428 = vsyncadd %s2419, %s2427
          %s2429 = smul.addr %s27, 2
          %s2430 = smul.addr %s2429, 16
          %s2431 = scalar_lea.hbm %s2, %s2430
          %s2433 = sshll.u32 %s2422, 4
          %s2434 = int_to_ptr.vmem [resolvable:$true] %s2433
          %2436 = dma.vmem_to_hbm [thread:$0]  %s2434, 32, %s2431, %s2419
        $region44: #{tpu_custom_call.1} parent=23 // pred_fallthru
          _
      $region24: #{tpu_custom_call.1} parent=5 // pred_fallthru
        _
      %p2437 = scmp.le.s32.totalorder 2, %s18
      // Predicated region
      $region45: #{tpu_custom_call.1} parent=5 // pred_check
        %p2438 = pneg %p2437
      $region46: #{tpu_custom_call.1} parent=5 // pred_check_branch
        %2440 = sbr.rel (%p2438) target = $region48
      $region47: #{tpu_custom_call.1} parent=5 // pred_region
        %s2441 = ssub.s32 %s18, 2
        // Predicated region
        $region49: #{tpu_custom_call.1} parent=47 // pred_check
          %p2442 = pneg %p87
        $region50: #{tpu_custom_call.1} parent=47 // pred_check_branch
          %2444 = sbr.rel (%p2442) target = $region52
        $region51: #{tpu_custom_call.1} parent=47 // pred_region
          %s2445 = sand.u32 %s72, 1
          %s2446 = scalar_lea.sflag [#allocation8], %s2445
          %s2447 = sand.u32 %s72, 1
          %s2448 = smul.addr %s2447, 2
          %s2449 = scalar_lea.vmem [#allocation9], %s2448
          %2450 = dma.done %s2446, 32
        $region52: #{tpu_custom_call.1} parent=47 // pred_fallthru
          _
      $region48: #{tpu_custom_call.1} parent=5 // pred_fallthru
        _
    $region6: #{tpu_custom_call.1} parent=1 // loop_footer
      %s22 = sadd.s32 1, %s18
    $region7: #{tpu_custom_call.1} parent=1 // loop_footer_branch
      %17 = sbr.rel target = $region3
    $region8: #{tpu_custom_call.1} parent=1 // loop_exit
      _
    %2451 = vsyncpa [#allocation7], 1
    %s2452 = scalar_lea.sflag [#allocation7], 1
    %2453 = vsyncpa %s2452, 1
    %2454 = vsyncpa [#allocation8], 1
    %s2455 = scalar_lea.sflag [#allocation8], 1
    %2456 = vsyncpa %s2455, 1

</llo_original>
